<compile_context>
chip_gen: v7x
topology: tpu7x:2x2x1
jax: 0.10.0
libtpu: 0.0.40
codegen_flags: <defaults>
</compile_context>

<pallas_src>
import numpy as np
import jax
import jax.numpy as jnp
from jax.experimental import pallas as pl
from jax.experimental.pallas import tpu as pltpu


def _goal_embed_kernel(nid_ref,     # (b_tile,1) or (bs,1) int32 — goal_node_id
                       type_ref,    # (b_tile,D) or (bs,D) f32   — folded goal-type rows
                       node_ref,    # (b_tile, tstps, num_nodes, out_dim)
                       wt_ref,      # (out_dim, out_dim) == W_node^T, resident
                       out_ref):    # (b_tile, tstps*out_dim) lane-dense OR (b_tile, tstps, out_dim)
    b_tile, tstps, num_nodes, out_dim = node_ref.shape

    if nid_ref.shape[0] == b_tile:
        # Per-tile blocks (preferred path).
        nid = nid_ref[...]                                   # (B, 1)
        type_rows = type_ref[...]                            # (B, D)
    else:
        # Fallback: resident small arrays, slice the current tile.
        start = pl.multiple_of(pl.program_id(0) * b_tile, b_tile)
        nid = nid_ref[pl.ds(start, b_tile), :]
        type_rows = type_ref[pl.ds(start, b_tile), :]

    nid = nid.reshape(b_tile, 1, 1)                          # (B,1,1) int32

    # Gather node_repr[b, :, nid[b], :] as an unrolled select over the small node axis.
    # Live set stays at one (B, T, D) slab (review item 1).
    node_goal = node_ref[:, :, 0, :]                         # (B, T, D)
    for n in range(1, num_nodes):
        node_goal = jnp.where(nid == n, node_ref[:, :, n, :], node_goal)
    # TODO(synk): for large num_nodes, gather only the needed row from HBM (manual DMA /
    # scalar-prefetch-driven index_map) instead of streaming all nodes then selecting.

    # Single tall MXU pass over the tile: (B*T, D) @ (D, D), f32 accumulation.
    y = jnp.dot(node_goal.reshape(b_tile * tstps, out_dim), wt_ref[...],
                preferred_element_type=jnp.float32)
    y = (y.reshape(b_tile, tstps, out_dim)
         + type_rows.astype(jnp.float32).reshape(b_tile, 1, out_dim))

    if out_ref.ndim == 2:                                    # lane-dense store path
        out_ref[...] = y.reshape(b_tile, tstps * out_dim).astype(out_ref.dtype)
    else:
        out_ref[...] = y.astype(out_ref.dtype)


def _pad(x, m):
    return -(-x // m) * m


def _vmem_budget_bytes():
    """Generation-aware block budget (double-buffered blocks must fit here)."""
    try:
        kind = jax.devices()[0].device_kind.lower()
    except Exception:
        return 12 << 20
    if "v5" in kind:
        return 10 << 20      # v5e: tightest (16 MiB default scoped VMEM)
    if "v6" in kind:
        return 24 << 20      # v6e: 128 MiB physical — bigger tiles are cheap wins
    return 16 << 20          # v7x (64 MiB physical / 32 MiB scoped) & others: conservative


def _pick_b_tile(bs, per_b_bytes, resident_bytes, budget_bytes):
    cap = max(1, int((budget_bytes - resident_bytes) // max(per_b_bytes, 1)))
    # Prefer an 8-aligned divisor of bs capped at bs//2: keeps >=2 grid steps for the
    # "parallel" axis (v7x has 2 TensorCores) and keeps per-tile blocks sublane-aligned.
    best = 0
    upper = min(cap, max(bs // 2, 1))
    t = 8
    while t <= upper:
        if bs % t == 0:
            best = t
        t += 8
    if best:
        return best
    if bs <= cap:
        return bs            # whole batch per step (all blocks == full dims)
    # Fallback: largest divisor of bs that fits (may be 1 for awkward bs).
    # TODO(synk): pad bs to a multiple of a good tile instead of degrading to tiny tiles.
    best = 1
    for t in range(2, min(cap, bs) + 1):
        if bs % t == 0:
            best = t
    return best


def goal_embed_forward(goals, node_repr, embed_table, weight, bias, *, use_bf16=False):
    """goals = (goal_id, goal_classnode_id, goal_node_id); node_repr: (bs, tstps, num_nodes, out_dim)."""
    goal_id, _goal_classnode_id, goal_node_id = goals   # classnode_id unused (as in PyTorch forward)
    bs, tstps, num_nodes, out_dim = node_repr.shape
    num_goals, type_dim = embed_table.shape
    out_dtype = node_repr.dtype
    f32 = jnp.float32

    # Host-side fold (tiny): Embedding + goal-type half of the Linear + bias -> per-b row.
    table_proj = embed_table.astype(f32) @ weight[:, :type_dim].astype(f32).T + bias.astype(f32)
    type_rows = table_proj[goal_id].astype(f32)                               # (bs, D)

    compute_dtype = jnp.bfloat16 if use_bf16 else node_repr.dtype
    node_in = node_repr.astype(compute_dtype)
    wt_node = jnp.transpose(weight[:, type_dim:]).astype(compute_dtype)       # (D, D) = W_node^T
    nid2d = goal_node_id.astype(jnp.int32).reshape(bs, 1)

    # ---- padded VMEM accounting (review item 6) ----
    csize = jnp.dtype(compute_dtype).itemsize
    osize = jnp.dtype(out_dtype).itemsize
    sub_c = 32 // csize                                   # sublane multiple: 8 (f32) / 16 (bf16)
    sub_o = 32 // osize
    per_b_node = tstps * _pad(num_nodes, sub_c) * _pad(out_dim, 128) * csize
    per_b_out = max(_pad(tstps * out_dim, 128),
                    _pad(tstps, sub_o) * _pad(out_dim, 128)) * osize
    per_b_type = _pad(out_dim, 128) * 4
    per_b_nid = 128 * 4
    per_b = 2 * (per_b_node + per_b_out + per_b_type + per_b_nid)             # double-buffered
    wt_bytes = _pad(out_dim, sub_c) * _pad(out_dim, 128) * csize
    resident = 2 * wt_bytes + (1 << 20)                                       # weight + slack

    budget = _vmem_budget_bytes()
    b_tile = _pick_b_tile(bs, per_b, resident, budget)
    grid = (bs // b_tile,)
    aligned = (b_tile == bs) or (b_tile % 8 == 0)
    lane_dense = aligned and (out_dim % 128 != 0) and ((tstps * out_dim) % 128 == 0)

    blocks_bytes = b_tile * per_b + 2 * wt_bytes
    if not aligned:
        blocks_bytes += 2 * _pad(bs, 8) * (128 + _pad(out_dim, 128)) * 4
    vmem_limit = int(min(32 << 20, max(blocks_bytes + (4 << 20), 16 << 20)))

    if aligned:
        nid_spec = pl.BlockSpec((b_tile, 1), lambda i: (i, 0))
        type_spec = pl.BlockSpec((b_tile, out_dim), lambda i: (i, 0))
    else:
        # Awkward b_tile: keep the small arrays resident; kernel slices with pl.ds.
        nid_spec = pl.BlockSpec((bs, 1), lambda i: (0, 0))
        type_spec = pl.BlockSpec((bs, out_dim), lambda i: (0, 0))

    node_spec = pl.BlockSpec((b_tile, tstps, num_nodes, out_dim), lambda i: (i, 0, 0, 0))
    wt_spec = pl.BlockSpec((out_dim, out_dim), lambda i: (0, 0))

    if lane_dense:
        out_shape = jax.ShapeDtypeStruct((bs, tstps * out_dim), out_dtype)
        out_spec = pl.BlockSpec((b_tile, tstps * out_dim), lambda i: (i, 0))
    else:
        out_shape = jax.ShapeDtypeStruct((bs, tstps, out_dim), out_dtype)
        out_spec = pl.BlockSpec((b_tile, tstps, out_dim), lambda i: (i, 0, 0))

    flops = 2 * bs * tstps * out_dim * out_dim
    bytes_accessed = (node_in.size * csize + bs * tstps * out_dim * osize
                      + bs * (out_dim + 1) * 4 + out_dim * out_dim * csize)
    cost = pl.CostEstimate(flops=flops, transcendentals=0, bytes_accessed=bytes_accessed)

    out = pl.pallas_call(
        _goal_embed_kernel,
        out_shape=out_shape,
        grid=grid,
        in_specs=[nid_spec, type_spec, node_spec, wt_spec],
        out_specs=out_spec,
        compiler_params=pltpu.CompilerParams(
            dimension_semantics=("parallel",),
            vmem_limit_bytes=vmem_limit),
        cost_estimate=cost,
    )(nid2d, type_rows, node_in, wt_node)

    if lane_dense:
        out = out.reshape(bs, tstps, out_dim)                 # contiguous, free
    return out


def goal_embed_reference(goals, node_repr, embed_table, weight, bias):
    """Pure-JAX reference matching the PyTorch forward exactly."""
    goal_id, _goal_classnode_id, goal_node_id = goals
    bs, tstps = node_repr.shape[:2]
    goal_type = embed_table[goal_id]                                     # (bs, type_dim)
    goal_type = jnp.broadcast_to(goal_type[:, None, :],
                                 (bs, tstps, goal_type.shape[-1]))       # unsqueeze + repeat
    node_goal = node_repr[jnp.arange(bs), :, goal_node_id, :]            # (bs, tstps, out_dim)
    x = jnp.concatenate([goal_type, node_goal], axis=2)
    return x @ weight.T + bias


if __name__ == "__main__":
    # Small shapes consistent with the module's forward (bs=16 so the batch-tiled,
    # multi-step grid path with lane-dense output is exercised).
    bs, tstps, num_nodes = 16, 8, 5
    num_goals, out_dim, type_dim = 6, 32, 3

    key = jax.random.PRNGKey(0)
    k1, k2, k3, k4, k5, k6, k7 = jax.random.split(key, 7)

    node_repr = jax.random.normal(k1, (bs, tstps, num_nodes, out_dim), jnp.float32)
    goal_id = jax.random.randint(k2, (bs,), 0, num_goals, dtype=jnp.int32)
    goal_classnode_id = jax.random.randint(k3, (bs,), 0, num_nodes, dtype=jnp.int32)  # unused by forward
    goal_node_id = jax.random.randint(k7, (bs,), 0, num_nodes, dtype=jnp.int32)
    goals = (goal_id, goal_classnode_id, goal_node_id)

    # Deterministic synthetic parameters (shapes from __init__: Embedding(num_goals, 3),
    # Linear(out_dim + 3, out_dim)).
    embed_table = jax.random.normal(k4, (num_goals, type_dim), jnp.float32)
    lim = 1.0 / np.sqrt(out_dim + type_dim)
    weight = jax.random.uniform(k5, (out_dim, out_dim + type_dim), jnp.float32, -lim, lim)
    bias = jax.random.uniform(k6, (out_dim,), jnp.float32, -lim, lim)

    out = goal_embed_forward(goals, node_repr, embed_table, weight, bias)
    out = jax.block_until_ready(out)

    ref = goal_embed_reference(goals, node_repr, embed_table, weight, bias)
    np.testing.assert_allclose(np.asarray(out), np.asarray(ref), rtol=1e-5, atol=1e-5)

    print("KERNEL_OK")
</pallas_src>

<mosaic_0001>
module attributes {stable_mosaic.version = 11 : i64} {
  func.func @_goal_embed_kernel(%arg0: i32, %arg1: memref<8x1xi32, #tpu.memory_space<vmem>>, %arg2: memref<8x32xf32, #tpu.memory_space<vmem>>, %arg3: memref<8x8x5x32xf32, #tpu.memory_space<vmem>>, %arg4: memref<32x32xf32, #tpu.memory_space<vmem>>, %arg5: memref<8x256xf32, #tpu.memory_space<vmem>>) attributes {dimension_semantics = [#tpu.dimension_semantics<parallel>], iteration_bounds = array<i64: 2>, scalar_prefetch = 0 : i64, scratch_operands = 0 : i64, tpu.core_type = #tpu.core_type<tc>, window_params = [{transform_indices = @transform_0, window_bounds = array<i64: 8, 1>}, {transform_indices = @transform_1, window_bounds = array<i64: 8, 32>}, {transform_indices = @transform_2, window_bounds = array<i64: 8, 8, 5, 32>}, {pipeline_mode = #tpu.pipeline_mode<synchronous>, transform_indices = @transform_3, window_bounds = array<i64: 32, 32>}, {transform_indices = @transform_4, window_bounds = array<i64: 8, 256>}]} {
    %c0 = arith.constant 0 : index
    %c0_0 = arith.constant 0 : index
    %0 = vector.load %arg1[%c0, %c0_0] : memref<8x1xi32, #tpu.memory_space<vmem>>, vector<8x1xi32>
    %c0_1 = arith.constant 0 : index
    %c0_2 = arith.constant 0 : index
    %1 = vector.load %arg2[%c0_1, %c0_2] : memref<8x32xf32, #tpu.memory_space<vmem>>, vector<8x32xf32>
    %2 = vector.shape_cast %0 : vector<8x1xi32> to vector<8x1x1xi32>
    %c0_3 = arith.constant 0 : index
    %c0_4 = arith.constant 0 : index
    %c0_5 = arith.constant 0 : index
    %c0_6 = arith.constant 0 : index
    %3 = vector.load %arg3[%c0_3, %c0_4, %c0_5, %c0_6] : memref<8x8x5x32xf32, #tpu.memory_space<vmem>>, vector<8x8x1x32xf32>
    %4 = vector.shape_cast %3 : vector<8x8x1x32xf32> to vector<8x8x32xf32>
    %c1_i32 = arith.constant 1 : i32
    %5 = vector.broadcast %c1_i32 : i32 to vector<8x1x1xi32>
    %6 = arith.cmpi eq, %2, %5 : vector<8x1x1xi32>
    %c0_7 = arith.constant 0 : index
    %c0_8 = arith.constant 0 : index
    %c1 = arith.constant 1 : index
    %c0_9 = arith.constant 0 : index
    %7 = vector.load %arg3[%c0_7, %c0_8, %c1, %c0_9] : memref<8x8x5x32xf32, #tpu.memory_space<vmem>>, vector<8x8x1x32xf32>
    %8 = vector.shape_cast %7 : vector<8x8x1x32xf32> to vector<8x8x32xf32>
    %9 = vector.shape_cast %6 : vector<8x1x1xi1> to vector<8x1x1xi1>
    %10 = vector.broadcast %9 : vector<8x1x1xi1> to vector<8x8x32xi1>
    %11 = arith.select %10, %8, %4 : vector<8x8x32xi1>, vector<8x8x32xf32>
    %c2_i32 = arith.constant 2 : i32
    %12 = vector.broadcast %c2_i32 : i32 to vector<8x1x1xi32>
    %13 = arith.cmpi eq, %2, %12 : vector<8x1x1xi32>
    %c0_10 = arith.constant 0 : index
    %c0_11 = arith.constant 0 : index
    %c2 = arith.constant 2 : index
    %c0_12 = arith.constant 0 : index
    %14 = vector.load %arg3[%c0_10, %c0_11, %c2, %c0_12] : memref<8x8x5x32xf32, #tpu.memory_space<vmem>>, vector<8x8x1x32xf32>
    %15 = vector.shape_cast %14 : vector<8x8x1x32xf32> to vector<8x8x32xf32>
    %16 = vector.shape_cast %13 : vector<8x1x1xi1> to vector<8x1x1xi1>
    %17 = vector.broadcast %16 : vector<8x1x1xi1> to vector<8x8x32xi1>
    %18 = arith.select %17, %15, %11 : vector<8x8x32xi1>, vector<8x8x32xf32>
    %c3_i32 = arith.constant 3 : i32
    %19 = vector.broadcast %c3_i32 : i32 to vector<8x1x1xi32>
    %20 = arith.cmpi eq, %2, %19 : vector<8x1x1xi32>
    %c0_13 = arith.constant 0 : index
    %c0_14 = arith.constant 0 : index
    %c3 = arith.constant 3 : index
    %c0_15 = arith.constant 0 : index
    %21 = vector.load %arg3[%c0_13, %c0_14, %c3, %c0_15] : memref<8x8x5x32xf32, #tpu.memory_space<vmem>>, vector<8x8x1x32xf32>
    %22 = vector.shape_cast %21 : vector<8x8x1x32xf32> to vector<8x8x32xf32>
    %23 = vector.shape_cast %20 : vector<8x1x1xi1> to vector<8x1x1xi1>
    %24 = vector.broadcast %23 : vector<8x1x1xi1> to vector<8x8x32xi1>
    %25 = arith.select %24, %22, %18 : vector<8x8x32xi1>, vector<8x8x32xf32>
    %c4_i32 = arith.constant 4 : i32
    %26 = vector.broadcast %c4_i32 : i32 to vector<8x1x1xi32>
    %27 = arith.cmpi eq, %2, %26 : vector<8x1x1xi32>
    %c0_16 = arith.constant 0 : index
    %c0_17 = arith.constant 0 : index
    %c4 = arith.constant 4 : index
    %c0_18 = arith.constant 0 : index
    %28 = vector.load %arg3[%c0_16, %c0_17, %c4, %c0_18] : memref<8x8x5x32xf32, #tpu.memory_space<vmem>>, vector<8x8x1x32xf32>
    %29 = vector.shape_cast %28 : vector<8x8x1x32xf32> to vector<8x8x32xf32>
    %30 = vector.shape_cast %27 : vector<8x1x1xi1> to vector<8x1x1xi1>
    %31 = vector.broadcast %30 : vector<8x1x1xi1> to vector<8x8x32xi1>
    %32 = arith.select %31, %29, %25 : vector<8x8x32xi1>, vector<8x8x32xf32>
    %33 = vector.shape_cast %32 : vector<8x8x32xf32> to vector<64x32xf32>
    %c0_19 = arith.constant 0 : index
    %c0_20 = arith.constant 0 : index
    %34 = vector.load %arg4[%c0_19, %c0_20] : memref<32x32xf32, #tpu.memory_space<vmem>>, vector<32x32xf32>
    %cst = arith.constant dense<0.000000e+00> : vector<64x32xf32>
    %35 = tpu.matmul %33, %34, %cst {dimension_numbers = #tpu.dot_dimension_numbers<[1], [0], [0], [1], [0, 0, 1, 1], [], []>} : vector<64x32xf32>, vector<32x32xf32>, vector<64x32xf32> -> vector<64x32xf32>
    %36 = vector.shape_cast %35 : vector<64x32xf32> to vector<8x8x32xf32>
    %37 = vector.shape_cast %1 : vector<8x32xf32> to vector<8x1x32xf32>
    %38 = vector.broadcast %37 : vector<8x1x32xf32> to vector<8x8x32xf32>
    %39 = arith.addf %36, %38 : vector<8x8x32xf32>
    %40 = vector.shape_cast %39 : vector<8x8x32xf32> to vector<8x256xf32>
    %c0_21 = arith.constant 0 : index
    %c0_22 = arith.constant 0 : index
    %41 = vector.load %arg5[%c0_21, %c0_22] : memref<8x256xf32, #tpu.memory_space<vmem>>, vector<8x256xf32>
    tpu.vector_store %arg5[%c0_21, %c0_22], %40 {strides = array<i32>} : memref<8x256xf32, #tpu.memory_space<vmem>>, vector<8x256xf32>,
    return
  }
  func.func @transform_0(%arg0: i32) -> (i32, i32) {
    %c0_i32 = arith.constant 0 : i32
    %c0_i32_0 = arith.constant 0 : i32
    return %arg0, %c0_i32 : i32, i32
  }
  func.func @transform_1(%arg0: i32) -> (i32, i32) {
    %c0_i32 = arith.constant 0 : i32
    %c0_i32_0 = arith.constant 0 : i32
    return %arg0, %c0_i32 : i32, i32
  }
  func.func @transform_2(%arg0: i32) -> (i32, i32, i32, i32) {
    %c0_i32 = arith.constant 0 : i32
    %c0_i32_0 = arith.constant 0 : i32
    %c0_i32_1 = arith.constant 0 : i32
    %c0_i32_2 = arith.constant 0 : i32
    return %arg0, %c0_i32, %c0_i32_0, %c0_i32_1 : i32, i32, i32, i32
  }
  func.func @transform_3(%arg0: i32) -> (i32, i32) {
    %c0_i32 = arith.constant 0 : i32
    %c0_i32_0 = arith.constant 0 : i32
    %c0_i32_1 = arith.constant 0 : i32
    return %c0_i32, %c0_i32_0 : i32, i32
  }
  func.func @transform_4(%arg0: i32) -> (i32, i32) {
    %c0_i32 = arith.constant 0 : i32
    %c0_i32_0 = arith.constant 0 : i32
    return %arg0, %c0_i32 : i32, i32
  }
}

</mosaic_0001>

<llo_original>
// kernel: tpu_custom_call.1
$region0: #{tpu_custom_call.1}
  #allocation0 [shape = 'u32[]', space=smem, size = 0x4, offset = 0x4, fixed_abs, tag = 'smem constant byte address 0x4 - core index']
  #allocation1 [shape = 'u32[144,128]{1,0:T(1,128)}', space=vmem, size = 0x12000, scoped, tag = 'internal scratch']
  %s0 = inlined_call_operand.vmem [shape: s32[16,1], index: 0, kind: input, shape index: {}]
  %s1 = inlined_call_operand.vmem [shape: f32[16,32], index: 1, kind: input, shape index: {}]
  %s2 = inlined_call_operand.vmem [shape: f32[16,8,5,32], index: 2, kind: input, shape index: {}]
  %s3 = inlined_call_operand.vmem [shape: f32[32,32], index: 3, kind: input, shape index: {}]
  %s4 = inlined_call_operand.hbm [shape: f32[16,256], index: 4, kind: output, shape index: {}]
  %s5 = sld [smem:[#allocation0]]
  $region49: #{tpu_custom_call.1} parent=0
    _
  %s7 = ssub.s32 1, %s5
  %s8 = scalar_select 0, %s7, %s5
  $region1: #{tpu_custom_call.1} parent=0
    #allocation2 [shape = 'u8[16384]{0}', space=vmem, size = 0x4000, scoped, tag = 'output window, operand 0']
    #allocation3 [shape = 's32[2]{0}', space=sflag, size = 0x8, scoped, tag = 'scoped memory for tpu_custom_call.1']
    %9 = vsyncpa [#allocation3], 0
    %s10 = scalar_lea.sflag [#allocation3], 1
    %11 = vsyncpa %s10, 0
    loop: start=0, step=1, limit=4
    $region2: #{tpu_custom_call.1} parent=1 // loop_pre_header
      _
    $region3: #{tpu_custom_call.1} parent=1 // loop_header
      %s13 = sphi 0, %s17
      %p14 = scmp.ge.s32.totalorder %s13, 4
      %s23 = sphi 0, %s25
      %s26 = sphi 0, %s23
      %s27 = sphi 0, %s26
      %s43 = sphi 0, %s27
      %s49 = sphi 0, %s51
      %s52 = sphi 0, %s49
      %s53 = sphi 0, %s52
      %s69 = sphi 0, %s53
      %s75 = sphi 0, %s77
      %s78 = sphi 0, %s75
      %s79 = sphi 0, %s78
      %s95 = sphi 0, %s79
      %s99 = sphi 0, %s99
      %s101 = sphi 0, %s99
      %s102 = sphi 0, %s101
      %s116 = sphi 0, %s102
      %s122 = sphi 0, %s124
      %s125 = sphi 0, %s122
      %s126 = sphi 0, %s125
      %s142 = sphi 0, %s126
    $region4: #{tpu_custom_call.1} parent=1 // loop_header_branch
      %16 = sbr.rel (%p14) target = $region8
    $region5: #{tpu_custom_call.1} parent=1 // loop_body
      %s18 = ssub.s32 %s13, 1
      %s19 = ssub.s32 %s13, 2
      %s20 = sadd.s32 %s13, 1
      %s21 = ssub.s32 %s13, %s20
      %p22 = scmp.eq.s32.totalorder %s21, 0
      %s24 = sadd.s32 %s23, 1
      %s25 = scalar_select %p22, %s23, %s24
      %p28 = pneg %p22
      %p29 = scmp.eq.s32.totalorder %s13, 1
      %p30 = por %p28, %p29
      %p31 = scmp.ne.s32.totalorder %s23, %s26
      %p32 = scmp.eq.s32.totalorder %s13, 0
      %p33 = por %p31, %p32
      %p34 = scmp.ne.s32.totalorder %s23, %s26
      %p35 = scmp.eq.s32.totalorder %s18, 1
      %p36 = por %p34, %p35
      %p37 = scmp.ne.s32.totalorder %s26, %s27
      %p38 = scmp.eq.s32.totalorder %s18, 0
      %p39 = por %p37, %p38
      %p40 = scmp.ne.s32.totalorder %s26, %s27
      %p41 = scmp.eq.s32.totalorder %s19, 1
      %p42 = por %p40, %p41
      %p44 = scmp.ne.s32.totalorder %s27, %s43
      %p45 = scmp.eq.s32.totalorder %s19, 0
      %p46 = por %p44, %p45
      %s47 = ssub.s32 %s13, %s20
      %p48 = scmp.eq.s32.totalorder %s47, 0
      %s50 = sadd.s32 %s49, 1
      %s51 = scalar_select %p48, %s49, %s50
      %p54 = pneg %p48
      %p55 = scmp.eq.s32.totalorder %s13, 1
      %p56 = por %p54, %p55
      %p57 = scmp.ne.s32.totalorder %s49, %s52
      %p58 = scmp.eq.s32.totalorder %s13, 0
      %p59 = por %p57, %p58
      %p60 = scmp.ne.s32.totalorder %s49, %s52
      %p61 = scmp.eq.s32.totalorder %s18, 1
      %p62 = por %p60, %p61
      %p63 = scmp.ne.s32.totalorder %s52, %s53
      %p64 = scmp.eq.s32.totalorder %s18, 0
      %p65 = por %p63, %p64
      %p66 = scmp.ne.s32.totalorder %s52, %s53
      %p67 = scmp.eq.s32.totalorder %s19, 1
      %p68 = por %p66, %p67
      %p70 = scmp.ne.s32.totalorder %s53, %s69
      %p71 = scmp.eq.s32.totalorder %s19, 0
      %p72 = por %p70, %p71
      %s73 = ssub.s32 %s13, %s20
      %p74 = scmp.eq.s32.totalorder %s73, 0
      %s76 = sadd.s32 %s75, 1
      %s77 = scalar_select %p74, %s75, %s76
      %p80 = pneg %p74
      %p81 = scmp.eq.s32.totalorder %s13, 1
      %p82 = por %p80, %p81
      %p83 = scmp.ne.s32.totalorder %s75, %s78
      %p84 = scmp.eq.s32.totalorder %s13, 0
      %p85 = por %p83, %p84
      %p86 = scmp.ne.s32.totalorder %s75, %s78
      %p87 = scmp.eq.s32.totalorder %s18, 1
      %p88 = por %p86, %p87
      %p89 = scmp.ne.s32.totalorder %s78, %s79
      %p90 = scmp.eq.s32.totalorder %s18, 0
      %p91 = por %p89, %p90
      %p92 = scmp.ne.s32.totalorder %s78, %s79
      %p93 = scmp.eq.s32.totalorder %s19, 1
      %p94 = por %p92, %p93
      %p96 = scmp.ne.s32.totalorder %s79, %s95
      %p97 = scmp.eq.s32.totalorder %s19, 0
      %p98 = por %p96, %p97
      %s100 = sadd.s32 %s99, 1
      %p103 = scmp.eq.s32.totalorder %s13, 1
      %p104 = scmp.ne.s32.totalorder %s99, %s101
      %p105 = scmp.eq.s32.totalorder %s13, 0
      %p106 = por %p104, %p105
      %p107 = scmp.ne.s32.totalorder %s99, %s101
      %p108 = scmp.eq.s32.totalorder %s18, 1
      %p109 = por %p107, %p108
      %p110 = scmp.ne.s32.totalorder %s101, %s102
      %p111 = scmp.eq.s32.totalorder %s18, 0
      %p112 = por %p110, %p111
      %p113 = scmp.ne.s32.totalorder %s101, %s102
      %p114 = scmp.eq.s32.totalorder %s19, 1
      %p115 = por %p113, %p114
      %p117 = scmp.ne.s32.totalorder %s102, %s116
      %p118 = scmp.eq.s32.totalorder %s19, 0
      %p119 = por %p117, %p118
      %s120 = ssub.s32 %s13, %s20
      %p121 = scmp.eq.s32.totalorder %s120, 0
      %s123 = sadd.s32 %s122, 1
      %s124 = scalar_select %p121, %s122, %s123
      %p127 = pneg %p121
      %p128 = scmp.eq.s32.totalorder %s13, 1
      %p129 = por %p127, %p128
      %p130 = scmp.ne.s32.totalorder %s122, %s125
      %p131 = scmp.eq.s32.totalorder %s13, 0
      %p132 = por %p130, %p131
      %p133 = scmp.ne.s32.totalorder %s122, %s125
      %p134 = scmp.eq.s32.totalorder %s18, 1
      %p135 = por %p133, %p134
      %p136 = scmp.ne.s32.totalorder %s125, %s126
      %p137 = scmp.eq.s32.totalorder %s18, 0
      %p138 = por %p136, %p137
      %p139 = scmp.ne.s32.totalorder %s125, %s126
      %p140 = scmp.eq.s32.totalorder %s19, 1
      %p141 = por %p139, %p140
      %p143 = scmp.ne.s32.totalorder %s126, %s142
      %p144 = scmp.eq.s32.totalorder %s19, 0
      %p145 = por %p143, %p144
      %p146 = scmp.le.s32.totalorder 1, %s13
      %p147 = scmp.lt.s32.totalorder %s13, 3
      %p148 = pnand %p146, %p147
      %p149 = pneg %p148
      // Predicated region
      $region9: #{tpu_custom_call.1} parent=5 // pred_check
        _
      $region10: #{tpu_custom_call.1} parent=5 // pred_check_branch
        %151 = sbr.rel (%p148) target = $region12
      $region11: #{tpu_custom_call.1} parent=5 // pred_region
        %s152 = ssub.s32 %s13, 1
        // Predicated region
        $region13: #{tpu_custom_call.1} parent=11 // pred_check
          %p153 = pneg %p112
        $region14: #{tpu_custom_call.1} parent=11 // pred_check_branch
          %155 = sbr.rel (%p153) target = $region16
        $region15: #{tpu_custom_call.1} parent=11 // pred_region
          _
        $region16: #{tpu_custom_call.1} parent=11 // pred_fallthru
          _
      $region12: #{tpu_custom_call.1} parent=5 // pred_fallthru
        _
      %p156 = scmp.lt.s32.totalorder %s13, 2
      // Predicated region
      $region17: #{tpu_custom_call.1} parent=5 // pred_check
        %p157 = pneg %p156
      $region18: #{tpu_custom_call.1} parent=5 // pred_check_branch
        %159 = sbr.rel (%p157) target = $region20
      $region19: #{tpu_custom_call.1} parent=5 // pred_region
        // Predicated region
        $region21: #{tpu_custom_call.1} parent=19 // pred_check
          %p160 = pneg %p33
        $region22: #{tpu_custom_call.1} parent=19 // pred_check_branch
          %162 = sbr.rel (%p160) target = $region24
        $region23: #{tpu_custom_call.1} parent=19 // pred_region
          %p163 = scmp.lt.s32.totalorder %s13, 1
          %s164 = scalar_select %p163, %s13, 1
          %s165 = smul.addr %s164, 8
          %s166 = scalar_lea.vmem %s0, %s165
        $region24: #{tpu_custom_call.1} parent=19 // pred_fallthru
          _
        // Predicated region
        $region25: #{tpu_custom_call.1} parent=19 // pred_check
          %p167 = pneg %p59
        $region26: #{tpu_custom_call.1} parent=19 // pred_check_branch
          %169 = sbr.rel (%p167) target = $region28
        $region27: #{tpu_custom_call.1} parent=19 // pred_region
          %p170 = scmp.lt.s32.totalorder %s13, 1
          %s171 = scalar_select %p170, %s13, 1
          %s172 = smul.addr %s171, 8
          %s173 = scalar_lea.vmem %s1, %s172
        $region28: #{tpu_custom_call.1} parent=19 // pred_fallthru
          _
        // Predicated region
        $region29: #{tpu_custom_call.1} parent=19 // pred_check
          %p174 = pneg %p85
        $region30: #{tpu_custom_call.1} parent=19 // pred_check_branch
          %176 = sbr.rel (%p174) target = $region32
        $region31: #{tpu_custom_call.1} parent=19 // pred_region
          %s177 = smul.u32 8, %s13
          %p178 = scmp.lt.s32.totalorder %s177, 15
          %s179 = scalar_select %p178, %s177, 15
          %s180 = smul.addr %s179, 8
          %s181 = smul.addr %s180, 8
          %s182 = scalar_lea.vmem %s2, %s181
          %s183 = smul.u32 8, %s13
        $region32: #{tpu_custom_call.1} parent=19 // pred_fallthru
          _
      $region20: #{tpu_custom_call.1} parent=5 // pred_fallthru
        _
      %p184 = scmp.le.s32.totalorder 1, %s13
      %p185 = scmp.lt.s32.totalorder %s13, 3
      %p186 = pnand %p184, %p185
      %p187 = pneg %p186
      // Predicated region
      $region33: #{tpu_custom_call.1} parent=5 // pred_check
        _
      $region34: #{tpu_custom_call.1} parent=5 // pred_check_branch
        %189 = sbr.rel (%p186) target = $region36
      $region35: #{tpu_custom_call.1} parent=5 // pred_region
        %s190 = ssub.s32 %s13, 1
        %p191 = scmp.lt.s32.totalorder %s18, 1
        %s192 = scalar_select %p191, %s18, 1
        %s193 = smul.addr %s192, 8
        %s194 = scalar_lea.vmem %s0, %s193
        %p195 = pneg %p39
        %p196 = pneg %p36
        %p197 = scmp.lt.s32.totalorder %s18, 1
        %s198 = scalar_select %p197, %s18, 1
        %s199 = smul.addr %s198, 8
        %s200 = scalar_lea.vmem %s1, %s199
        %p201 = pneg %p65
        %p202 = pneg %p62
        %s203 = smul.u32 8, %s18
        %p204 = scmp.lt.s32.totalorder %s203, 15
        %s205 = scalar_select %p204, %s203, 15
        %s206 = smul.addr %s205, 8
        %s207 = smul.addr %s206, 8
        %s208 = scalar_lea.vmem %s2, %s207
        %p209 = pneg %p91
        %p210 = pneg %p88
        %p211 = pneg %p112
        %p212 = pneg %p109
        %p213 = pneg %p138
        %p214 = pneg %p135
        %s215 = sand.u32 %s125, 1
        %s216 = scalar_lea.sflag [#allocation3], %s215
        %s217 = sand.u32 %s125, 1
        %s218 = smul.addr %s217, 16
        %s219 = scalar_lea.vmem [#allocation2], %s218
        %p220 = scmp.lt.s32.totalorder %s18, 1
        %s221 = scalar_select %p220, %s18, 1
        %s222 = smul.addr %s221, 8
        %s223 = scalar_lea.vmem %s0, %s222
        %p224 = scmp.lt.s32.totalorder %s18, 1
        %s225 = scalar_select %p224, %s18, 1
        %s226 = smul.addr %s225, 8
        %s227 = scalar_lea.vmem %s1, %s226
        %s228 = smul.u32 8, %s18
        %p229 = scmp.lt.s32.totalorder %s228, 15
        %s230 = scalar_select %p229, %s228, 15
        %s231 = smul.addr %s230, 8
        %s232 = smul.addr %s231, 8
        %s233 = scalar_lea.vmem %s2, %s232
        %s234 = smul.u32 8, %s18
        %v235 = vld [vmem:[%s223] sm:$0xff]
        %v236 = vld [vmem:[%s227] sm:$0xff]
        %v237 = vcombine.high %v235, %v235
        %v239 = vunpack.c.l.s4 1966171168
        %v240 = vunpack.c.0.s8 %v239
        %v241 = vlaneseq
        %v242 = vshrl.u32 %v241, 7
        %v243 = vsub.s32 %v240, %v242
        %v244 = vrot.slane %v235, %v243
        %v246 = vunpack.c.l.s4 1966171168
        %v247 = vunpack.c.0.s8 %v246
        %v248 = vlaneseq
        %v249 = vshrl.u32 %v248, 7
        %v250 = vsub.s32 %v247, %v249
        %v251 = vrot.slane %v237, %v250
        %v252 = vcombine.high %v244, %v244
        %v253 = vcombine.high %v251, %v251
        %v255 = vunpack.c.l.s4 1966171168
        %v256 = vunpack.c.0.s8 %v255
        %v257 = vlaneseq
        %v258 = vshrl.u32 %v257, 7
        %v259 = vsub.s32 %v256, %v258
        %v260 = vrot.slane %v244, %v259
        %v262 = vunpack.c.l.s4 1966171168
        %v263 = vunpack.c.0.s8 %v262
        %v264 = vlaneseq
        %v265 = vshrl.u32 %v264, 7
        %v266 = vsub.s32 %v263, %v265
        %v267 = vrot.slane %v251, %v266
        %v269 = vunpack.c.l.s4 1966171168
        %v270 = vunpack.c.0.s8 %v269
        %v271 = vlaneseq
        %v272 = vshrl.u32 %v271, 7
        %v273 = vsub.s32 %v270, %v272
        %v274 = vrot.slane %v252, %v273
        %v276 = vunpack.c.l.s4 1966171168
        %v277 = vunpack.c.0.s8 %v276
        %v278 = vlaneseq
        %v279 = vshrl.u32 %v278, 7
        %v280 = vsub.s32 %v277, %v279
        %v281 = vrot.slane %v253, %v280
        %v282 = vcombine.high %v260, %v260
        %v283 = vcombine.high %v267, %v267
        %v284 = vcombine.high %v274, %v274
        %v285 = vcombine.high %v281, %v281
        %v286 = vld [vmem:[%s233] sm:$0x1]
        %v287 = vld [vmem:[%s233 + $0x8] sm:$0x1]
        %v288 = vld [vmem:[%s233 + $0x10] sm:$0x1]
        %v289 = vld [vmem:[%s233 + $0x18] sm:$0x1]
        %v290 = vld [vmem:[%s233 + $0x20] sm:$0x1]
        %v291 = vld [vmem:[%s233 + $0x28] sm:$0x1]
        %v292 = vld [vmem:[%s233 + $0x30] sm:$0x1]
        %v293 = vld [vmem:[%s233 + $0x38] sm:$0x1]
        %v294 = vld [vmem:[%s233 + $0x40] sm:$0x1]
        %v295 = vld [vmem:[%s233 + $0x48] sm:$0x1]
        %v296 = vld [vmem:[%s233 + $0x50] sm:$0x1]
        %v297 = vld [vmem:[%s233 + $0x58] sm:$0x1]
        %v298 = vld [vmem:[%s233 + $0x60] sm:$0x1]
        %v299 = vld [vmem:[%s233 + $0x68] sm:$0x1]
        %v300 = vld [vmem:[%s233 + $0x70] sm:$0x1]
        %v301 = vld [vmem:[%s233 + $0x78] sm:$0x1]
        %v302 = vld [vmem:[%s233 + $0x80] sm:$0x1]
        %v303 = vld [vmem:[%s233 + $0x88] sm:$0x1]
        %v304 = vld [vmem:[%s233 + $0x90] sm:$0x1]
        %v305 = vld [vmem:[%s233 + $0x98] sm:$0x1]
        %v306 = vld [vmem:[%s233 + $0xa0] sm:$0x1]
        %v307 = vld [vmem:[%s233 + $0xa8] sm:$0x1]
        %v308 = vld [vmem:[%s233 + $0xb0] sm:$0x1]
        %v309 = vld [vmem:[%s233 + $0xb8] sm:$0x1]
        %v310 = vld [vmem:[%s233 + $0xc0] sm:$0x1]
        %v311 = vld [vmem:[%s233 + $0xc8] sm:$0x1]
        %v312 = vld [vmem:[%s233 + $0xd0] sm:$0x1]
        %v313 = vld [vmem:[%s233 + $0xd8] sm:$0x1]
        %v314 = vld [vmem:[%s233 + $0xe0] sm:$0x1]
        %v315 = vld [vmem:[%s233 + $0xe8] sm:$0x1]
        %v316 = vld [vmem:[%s233 + $0xf0] sm:$0x1]
        %v317 = vld [vmem:[%s233 + $0xf8] sm:$0x1]
        %v318 = vld [vmem:[%s233 + $0x100] sm:$0x1]
        %v319 = vld [vmem:[%s233 + $0x108] sm:$0x1]
        %v320 = vld [vmem:[%s233 + $0x110] sm:$0x1]
        %v321 = vld [vmem:[%s233 + $0x118] sm:$0x1]
        %v322 = vld [vmem:[%s233 + $0x120] sm:$0x1]
        %v323 = vld [vmem:[%s233 + $0x128] sm:$0x1]
        %v324 = vld [vmem:[%s233 + $0x130] sm:$0x1]
        %v325 = vld [vmem:[%s233 + $0x138] sm:$0x1]
        %v326 = vld [vmem:[%s233 + $0x140] sm:$0x1]
        %v327 = vld [vmem:[%s233 + $0x148] sm:$0x1]
        %v328 = vld [vmem:[%s233 + $0x150] sm:$0x1]
        %v329 = vld [vmem:[%s233 + $0x158] sm:$0x1]
        %v330 = vld [vmem:[%s233 + $0x160] sm:$0x1]
        %v331 = vld [vmem:[%s233 + $0x168] sm:$0x1]
        %v332 = vld [vmem:[%s233 + $0x170] sm:$0x1]
        %v333 = vld [vmem:[%s233 + $0x178] sm:$0x1]
        %v334 = vld [vmem:[%s233 + $0x180] sm:$0x1]
        %v335 = vld [vmem:[%s233 + $0x188] sm:$0x1]
        %v336 = vld [vmem:[%s233 + $0x190] sm:$0x1]
        %v337 = vld [vmem:[%s233 + $0x198] sm:$0x1]
        %v338 = vld [vmem:[%s233 + $0x1a0] sm:$0x1]
        %v339 = vld [vmem:[%s233 + $0x1a8] sm:$0x1]
        %v340 = vld [vmem:[%s233 + $0x1b0] sm:$0x1]
        %v341 = vld [vmem:[%s233 + $0x1b8] sm:$0x1]
        %v342 = vld [vmem:[%s233 + $0x1c0] sm:$0x1]
        %v343 = vld [vmem:[%s233 + $0x1c8] sm:$0x1]
        %v344 = vld [vmem:[%s233 + $0x1d0] sm:$0x1]
        %v345 = vld [vmem:[%s233 + $0x1d8] sm:$0x1]
        %v346 = vld [vmem:[%s233 + $0x1e0] sm:$0x1]
        %v347 = vld [vmem:[%s233 + $0x1e8] sm:$0x1]
        %v348 = vld [vmem:[%s233 + $0x1f0] sm:$0x1]
        %v349 = vld [vmem:[%s233 + $0x1f8] sm:$0x1]
        %vm350 = vcmp.eq.s32.totalorder %v260, 1
        %vm351 = vcmp.eq.s32.totalorder %v274, 1
        %vm352 = vcmp.eq.s32.totalorder %v282, 1
        %vm353 = vcmp.eq.s32.totalorder %v284, 1
        %vm354 = vcmp.eq.s32.totalorder %v267, 1
        %vm355 = vcmp.eq.s32.totalorder %v281, 1
        %vm356 = vcmp.eq.s32.totalorder %v283, 1
        %vm357 = vcmp.eq.s32.totalorder %v285, 1
        %v358 = vld [vmem:[%s233 + $0x1] sm:$0x1]
        %v359 = vld [vmem:[%s233 + $0x9] sm:$0x1]
        %v360 = vld [vmem:[%s233 + $0x11] sm:$0x1]
        %v361 = vld [vmem:[%s233 + $0x19] sm:$0x1]
        %v362 = vld [vmem:[%s233 + $0x21] sm:$0x1]
        %v363 = vld [vmem:[%s233 + $0x29] sm:$0x1]
        %v364 = vld [vmem:[%s233 + $0x31] sm:$0x1]
        %v365 = vld [vmem:[%s233 + $0x39] sm:$0x1]
        %v366 = vld [vmem:[%s233 + $0x41] sm:$0x1]
        %v367 = vld [vmem:[%s233 + $0x49] sm:$0x1]
        %v368 = vld [vmem:[%s233 + $0x51] sm:$0x1]
        %v369 = vld [vmem:[%s233 + $0x59] sm:$0x1]
        %v370 = vld [vmem:[%s233 + $0x61] sm:$0x1]
        %v371 = vld [vmem:[%s233 + $0x69] sm:$0x1]
        %v372 = vld [vmem:[%s233 + $0x71] sm:$0x1]
        %v373 = vld [vmem:[%s233 + $0x79] sm:$0x1]
        %v374 = vld [vmem:[%s233 + $0x81] sm:$0x1]
        %v375 = vld [vmem:[%s233 + $0x89] sm:$0x1]
        %v376 = vld [vmem:[%s233 + $0x91] sm:$0x1]
        %v377 = vld [vmem:[%s233 + $0x99] sm:$0x1]
        %v378 = vld [vmem:[%s233 + $0xa1] sm:$0x1]
        %v379 = vld [vmem:[%s233 + $0xa9] sm:$0x1]
        %v380 = vld [vmem:[%s233 + $0xb1] sm:$0x1]
        %v381 = vld [vmem:[%s233 + $0xb9] sm:$0x1]
        %v382 = vld [vmem:[%s233 + $0xc1] sm:$0x1]
        %v383 = vld [vmem:[%s233 + $0xc9] sm:$0x1]
        %v384 = vld [vmem:[%s233 + $0xd1] sm:$0x1]
        %v385 = vld [vmem:[%s233 + $0xd9] sm:$0x1]
        %v386 = vld [vmem:[%s233 + $0xe1] sm:$0x1]
        %v387 = vld [vmem:[%s233 + $0xe9] sm:$0x1]
        %v388 = vld [vmem:[%s233 + $0xf1] sm:$0x1]
        %v389 = vld [vmem:[%s233 + $0xf9] sm:$0x1]
        %v390 = vld [vmem:[%s233 + $0x101] sm:$0x1]
        %v391 = vld [vmem:[%s233 + $0x109] sm:$0x1]
        %v392 = vld [vmem:[%s233 + $0x111] sm:$0x1]
        %v393 = vld [vmem:[%s233 + $0x119] sm:$0x1]
        %v394 = vld [vmem:[%s233 + $0x121] sm:$0x1]
        %v395 = vld [vmem:[%s233 + $0x129] sm:$0x1]
        %v396 = vld [vmem:[%s233 + $0x131] sm:$0x1]
        %v397 = vld [vmem:[%s233 + $0x139] sm:$0x1]
        %v398 = vld [vmem:[%s233 + $0x141] sm:$0x1]
        %v399 = vld [vmem:[%s233 + $0x149] sm:$0x1]
        %v400 = vld [vmem:[%s233 + $0x151] sm:$0x1]
        %v401 = vld [vmem:[%s233 + $0x159] sm:$0x1]
        %v402 = vld [vmem:[%s233 + $0x161] sm:$0x1]
        %v403 = vld [vmem:[%s233 + $0x169] sm:$0x1]
        %v404 = vld [vmem:[%s233 + $0x171] sm:$0x1]
        %v405 = vld [vmem:[%s233 + $0x179] sm:$0x1]
        %v406 = vld [vmem:[%s233 + $0x181] sm:$0x1]
        %v407 = vld [vmem:[%s233 + $0x189] sm:$0x1]
        %v408 = vld [vmem:[%s233 + $0x191] sm:$0x1]
        %v409 = vld [vmem:[%s233 + $0x199] sm:$0x1]
        %v410 = vld [vmem:[%s233 + $0x1a1] sm:$0x1]
        %v411 = vld [vmem:[%s233 + $0x1a9] sm:$0x1]
        %v412 = vld [vmem:[%s233 + $0x1b1] sm:$0x1]
        %v413 = vld [vmem:[%s233 + $0x1b9] sm:$0x1]
        %v414 = vld [vmem:[%s233 + $0x1c1] sm:$0x1]
        %v415 = vld [vmem:[%s233 + $0x1c9] sm:$0x1]
        %v416 = vld [vmem:[%s233 + $0x1d1] sm:$0x1]
        %v417 = vld [vmem:[%s233 + $0x1d9] sm:$0x1]
        %v418 = vld [vmem:[%s233 + $0x1e1] sm:$0x1]
        %v419 = vld [vmem:[%s233 + $0x1e9] sm:$0x1]
        %v420 = vld [vmem:[%s233 + $0x1f1] sm:$0x1]
        %v421 = vld [vmem:[%s233 + $0x1f9] sm:$0x1]
        %v422 = vsel %vm350, 1, 0
        %v423 = vsel %vm351, 1, 0
        %v424 = vsel %vm352, 1, 0
        %v425 = vsel %vm353, 1, 0
        %v426 = vsel %vm354, 1, 0
        %v427 = vsel %vm355, 1, 0
        %v428 = vsel %vm356, 1, 0
        %v429 = vsel %vm357, 1, 0
        %v430 = vlaneseq
        %v431 = vshrl.u32 %v430, 7
        %v432 = vsub.s32 0, %v431
        %v433 = vrot.slane %v422, %v432
        %v434 = vlaneseq
        %v435 = vshrl.u32 %v434, 7
        %v436 = vsub.s32 0, %v435
        %v437 = vrot.slane %v423, %v436
        %v438 = vlaneseq
        %v439 = vshrl.u32 %v438, 7
        %v440 = vsub.s32 0, %v439
        %v441 = vrot.slane %v424, %v440
        %v442 = vlaneseq
        %v443 = vshrl.u32 %v442, 7
        %v444 = vsub.s32 0, %v443
        %v445 = vrot.slane %v425, %v444
        %v446 = vlaneseq
        %v447 = vshrl.u32 %v446, 7
        %v448 = vsub.s32 0, %v447
        %v449 = vrot.slane %v426, %v448
        %v450 = vlaneseq
        %v451 = vshrl.u32 %v450, 7
        %v452 = vsub.s32 0, %v451
        %v453 = vrot.slane %v427, %v452
        %v454 = vlaneseq
        %v455 = vshrl.u32 %v454, 7
        %v456 = vsub.s32 0, %v455
        %v457 = vrot.slane %v428, %v456
        %v458 = vlaneseq
        %v459 = vshrl.u32 %v458, 7
        %v460 = vsub.s32 0, %v459
        %v461 = vrot.slane %v429, %v460
        %462 = vset.pattern.permute.xlu0 0
        %463 = vperm.xlu0 %462, %v433
        %v464 = vpop.permute.xlu0 %463
        %465 = vset.pattern.permute.xlu0 0
        %466 = vperm.xlu0 %465, %v437
        %v467 = vpop.permute.xlu0 %466
        %468 = vset.pattern.permute.xlu0 0
        %469 = vperm.xlu0 %468, %v441
        %v470 = vpop.permute.xlu0 %469
        %471 = vset.pattern.permute.xlu0 0
        %472 = vperm.xlu0 %471, %v445
        %v473 = vpop.permute.xlu0 %472
        %474 = vset.pattern.permute.xlu0 0
        %475 = vperm.xlu0 %474, %v449
        %v476 = vpop.permute.xlu0 %475
        %477 = vset.pattern.permute.xlu0 0
        %478 = vperm.xlu0 %477, %v453
        %v479 = vpop.permute.xlu0 %478
        %480 = vset.pattern.permute.xlu0 0
        %481 = vperm.xlu0 %480, %v457
        %v482 = vpop.permute.xlu0 %481
        %483 = vset.pattern.permute.xlu0 0
        %484 = vperm.xlu0 %483, %v461
        %v485 = vpop.permute.xlu0 %484
        %vm486 = vcmp.eq.s32.totalorder %v464, 1
        %vm487 = vcmp.eq.s32.totalorder %v467, 1
        %vm488 = vcmp.eq.s32.totalorder %v470, 1
        %vm489 = vcmp.eq.s32.totalorder %v473, 1
        %vm490 = vcmp.eq.s32.totalorder %v476, 1
        %vm491 = vcmp.eq.s32.totalorder %v479, 1
        %vm492 = vcmp.eq.s32.totalorder %v482, 1
        %vm493 = vcmp.eq.s32.totalorder %v485, 1
        %v494 = vsel %vm486, %v358, %v286
        %v495 = vsel %vm486, %v359, %v287
        %v496 = vsel %vm486, %v360, %v288
        %v497 = vsel %vm486, %v361, %v289
        %v498 = vsel %vm486, %v362, %v290
        %v499 = vsel %vm486, %v363, %v291
        %v500 = vsel %vm486, %v364, %v292
        %v501 = vsel %vm486, %v365, %v293
        %v502 = vsel %vm487, %v366, %v294
        %v503 = vsel %vm487, %v367, %v295
        %v504 = vsel %vm487, %v368, %v296
        %v505 = vsel %vm487, %v369, %v297
        %v506 = vsel %vm487, %v370, %v298
        %v507 = vsel %vm487, %v371, %v299
        %v508 = vsel %vm487, %v372, %v300
        %v509 = vsel %vm487, %v373, %v301
        %v510 = vsel %vm488, %v374, %v302
        %v511 = vsel %vm488, %v375, %v303
        %v512 = vsel %vm488, %v376, %v304
        %v513 = vsel %vm488, %v377, %v305
        %v514 = vsel %vm488, %v378, %v306
        %v515 = vsel %vm488, %v379, %v307
        %v516 = vsel %vm488, %v380, %v308
        %v517 = vsel %vm488, %v381, %v309
        %v518 = vsel %vm489, %v382, %v310
        %v519 = vsel %vm489, %v383, %v311
        %v520 = vsel %vm489, %v384, %v312
        %v521 = vsel %vm489, %v385, %v313
        %v522 = vsel %vm489, %v386, %v314
        %v523 = vsel %vm489, %v387, %v315
        %v524 = vsel %vm489, %v388, %v316
        %v525 = vsel %vm489, %v389, %v317
        %v526 = vsel %vm490, %v390, %v318
        %v527 = vsel %vm490, %v391, %v319
        %v528 = vsel %vm490, %v392, %v320
        %v529 = vsel %vm490, %v393, %v321
        %v530 = vsel %vm490, %v394, %v322
        %v531 = vsel %vm490, %v395, %v323
        %v532 = vsel %vm490, %v396, %v324
        %v533 = vsel %vm490, %v397, %v325
        %v534 = vsel %vm491, %v398, %v326
        %v535 = vsel %vm491, %v399, %v327
        %v536 = vsel %vm491, %v400, %v328
        %v537 = vsel %vm491, %v401, %v329
        %v538 = vsel %vm491, %v402, %v330
        %v539 = vsel %vm491, %v403, %v331
        %v540 = vsel %vm491, %v404, %v332
        %v541 = vsel %vm491, %v405, %v333
        %v542 = vsel %vm492, %v406, %v334
        %v543 = vsel %vm492, %v407, %v335
        %v544 = vsel %vm492, %v408, %v336
        %v545 = vsel %vm492, %v409, %v337
        %v546 = vsel %vm492, %v410, %v338
        %v547 = vsel %vm492, %v411, %v339
        %v548 = vsel %vm492, %v412, %v340
        %v549 = vsel %vm492, %v413, %v341
        %v550 = vsel %vm493, %v414, %v342
        %v551 = vsel %vm493, %v415, %v343
        %v552 = vsel %vm493, %v416, %v344
        %v553 = vsel %vm493, %v417, %v345
        %v554 = vsel %vm493, %v418, %v346
        %v555 = vsel %vm493, %v419, %v347
        %v556 = vsel %vm493, %v420, %v348
        %v557 = vsel %vm493, %v421, %v349
        %vm558 = vcmp.eq.s32.totalorder %v260, 2
        %vm559 = vcmp.eq.s32.totalorder %v274, 2
        %vm560 = vcmp.eq.s32.totalorder %v282, 2
        %vm561 = vcmp.eq.s32.totalorder %v284, 2
        %vm562 = vcmp.eq.s32.totalorder %v267, 2
        %vm563 = vcmp.eq.s32.totalorder %v281, 2
        %vm564 = vcmp.eq.s32.totalorder %v283, 2
        %vm565 = vcmp.eq.s32.totalorder %v285, 2
        %v566 = vld [vmem:[%s233 + $0x2] sm:$0x1]
        %v567 = vld [vmem:[%s233 + $0xa] sm:$0x1]
        %v568 = vld [vmem:[%s233 + $0x12] sm:$0x1]
        %v569 = vld [vmem:[%s233 + $0x1a] sm:$0x1]
        %v570 = vld [vmem:[%s233 + $0x22] sm:$0x1]
        %v571 = vld [vmem:[%s233 + $0x2a] sm:$0x1]
        %v572 = vld [vmem:[%s233 + $0x32] sm:$0x1]
        %v573 = vld [vmem:[%s233 + $0x3a] sm:$0x1]
        %v574 = vld [vmem:[%s233 + $0x42] sm:$0x1]
        %v575 = vld [vmem:[%s233 + $0x4a] sm:$0x1]
        %v576 = vld [vmem:[%s233 + $0x52] sm:$0x1]
        %v577 = vld [vmem:[%s233 + $0x5a] sm:$0x1]
        %v578 = vld [vmem:[%s233 + $0x62] sm:$0x1]
        %v579 = vld [vmem:[%s233 + $0x6a] sm:$0x1]
        %v580 = vld [vmem:[%s233 + $0x72] sm:$0x1]
        %v581 = vld [vmem:[%s233 + $0x7a] sm:$0x1]
        %v582 = vld [vmem:[%s233 + $0x82] sm:$0x1]
        %v583 = vld [vmem:[%s233 + $0x8a] sm:$0x1]
        %v584 = vld [vmem:[%s233 + $0x92] sm:$0x1]
        %v585 = vld [vmem:[%s233 + $0x9a] sm:$0x1]
        %v586 = vld [vmem:[%s233 + $0xa2] sm:$0x1]
        %v587 = vld [vmem:[%s233 + $0xaa] sm:$0x1]
        %v588 = vld [vmem:[%s233 + $0xb2] sm:$0x1]
        %v589 = vld [vmem:[%s233 + $0xba] sm:$0x1]
        %v590 = vld [vmem:[%s233 + $0xc2] sm:$0x1]
        %v591 = vld [vmem:[%s233 + $0xca] sm:$0x1]
        %v592 = vld [vmem:[%s233 + $0xd2] sm:$0x1]
        %v593 = vld [vmem:[%s233 + $0xda] sm:$0x1]
        %v594 = vld [vmem:[%s233 + $0xe2] sm:$0x1]
        %v595 = vld [vmem:[%s233 + $0xea] sm:$0x1]
        %v596 = vld [vmem:[%s233 + $0xf2] sm:$0x1]
        %v597 = vld [vmem:[%s233 + $0xfa] sm:$0x1]
        %v598 = vld [vmem:[%s233 + $0x102] sm:$0x1]
        %v599 = vld [vmem:[%s233 + $0x10a] sm:$0x1]
        %v600 = vld [vmem:[%s233 + $0x112] sm:$0x1]
        %v601 = vld [vmem:[%s233 + $0x11a] sm:$0x1]
        %v602 = vld [vmem:[%s233 + $0x122] sm:$0x1]
        %v603 = vld [vmem:[%s233 + $0x12a] sm:$0x1]
        %v604 = vld [vmem:[%s233 + $0x132] sm:$0x1]
        %v605 = vld [vmem:[%s233 + $0x13a] sm:$0x1]
        %v606 = vld [vmem:[%s233 + $0x142] sm:$0x1]
        %v607 = vld [vmem:[%s233 + $0x14a] sm:$0x1]
        %v608 = vld [vmem:[%s233 + $0x152] sm:$0x1]
        %v609 = vld [vmem:[%s233 + $0x15a] sm:$0x1]
        %v610 = vld [vmem:[%s233 + $0x162] sm:$0x1]
        %v611 = vld [vmem:[%s233 + $0x16a] sm:$0x1]
        %v612 = vld [vmem:[%s233 + $0x172] sm:$0x1]
        %v613 = vld [vmem:[%s233 + $0x17a] sm:$0x1]
        %v614 = vld [vmem:[%s233 + $0x182] sm:$0x1]
        %v615 = vld [vmem:[%s233 + $0x18a] sm:$0x1]
        %v616 = vld [vmem:[%s233 + $0x192] sm:$0x1]
        %v617 = vld [vmem:[%s233 + $0x19a] sm:$0x1]
        %v618 = vld [vmem:[%s233 + $0x1a2] sm:$0x1]
        %v619 = vld [vmem:[%s233 + $0x1aa] sm:$0x1]
        %v620 = vld [vmem:[%s233 + $0x1b2] sm:$0x1]
        %v621 = vld [vmem:[%s233 + $0x1ba] sm:$0x1]
        %v622 = vld [vmem:[%s233 + $0x1c2] sm:$0x1]
        %v623 = vld [vmem:[%s233 + $0x1ca] sm:$0x1]
        %v624 = vld [vmem:[%s233 + $0x1d2] sm:$0x1]
        %v625 = vld [vmem:[%s233 + $0x1da] sm:$0x1]
        %v626 = vld [vmem:[%s233 + $0x1e2] sm:$0x1]
        %v627 = vld [vmem:[%s233 + $0x1ea] sm:$0x1]
        %v628 = vld [vmem:[%s233 + $0x1f2] sm:$0x1]
        %v629 = vld [vmem:[%s233 + $0x1fa] sm:$0x1]
        %v630 = vsel %vm558, 1, 0
        %v631 = vsel %vm559, 1, 0
        %v632 = vsel %vm560, 1, 0
        %v633 = vsel %vm561, 1, 0
        %v634 = vsel %vm562, 1, 0
        %v635 = vsel %vm563, 1, 0
        %v636 = vsel %vm564, 1, 0
        %v637 = vsel %vm565, 1, 0
        %v638 = vlaneseq
        %v639 = vshrl.u32 %v638, 7
        %v640 = vsub.s32 0, %v639
        %v641 = vrot.slane %v630, %v640
        %v642 = vlaneseq
        %v643 = vshrl.u32 %v642, 7
        %v644 = vsub.s32 0, %v643
        %v645 = vrot.slane %v631, %v644
        %v646 = vlaneseq
        %v647 = vshrl.u32 %v646, 7
        %v648 = vsub.s32 0, %v647
        %v649 = vrot.slane %v632, %v648
        %v650 = vlaneseq
        %v651 = vshrl.u32 %v650, 7
        %v652 = vsub.s32 0, %v651
        %v653 = vrot.slane %v633, %v652
        %v654 = vlaneseq
        %v655 = vshrl.u32 %v654, 7
        %v656 = vsub.s32 0, %v655
        %v657 = vrot.slane %v634, %v656
        %v658 = vlaneseq
        %v659 = vshrl.u32 %v658, 7
        %v660 = vsub.s32 0, %v659
        %v661 = vrot.slane %v635, %v660
        %v662 = vlaneseq
        %v663 = vshrl.u32 %v662, 7
        %v664 = vsub.s32 0, %v663
        %v665 = vrot.slane %v636, %v664
        %v666 = vlaneseq
        %v667 = vshrl.u32 %v666, 7
        %v668 = vsub.s32 0, %v667
        %v669 = vrot.slane %v637, %v668
        %670 = vset.pattern.permute.xlu0 0
        %671 = vperm.xlu0 %670, %v641
        %v672 = vpop.permute.xlu0 %671
        %673 = vset.pattern.permute.xlu0 0
        %674 = vperm.xlu0 %673, %v645
        %v675 = vpop.permute.xlu0 %674
        %676 = vset.pattern.permute.xlu0 0
        %677 = vperm.xlu0 %676, %v649
        %v678 = vpop.permute.xlu0 %677
        %679 = vset.pattern.permute.xlu0 0
        %680 = vperm.xlu0 %679, %v653
        %v681 = vpop.permute.xlu0 %680
        %682 = vset.pattern.permute.xlu0 0
        %683 = vperm.xlu0 %682, %v657
        %v684 = vpop.permute.xlu0 %683
        %685 = vset.pattern.permute.xlu0 0
        %686 = vperm.xlu0 %685, %v661
        %v687 = vpop.permute.xlu0 %686
        %688 = vset.pattern.permute.xlu0 0
        %689 = vperm.xlu0 %688, %v665
        %v690 = vpop.permute.xlu0 %689
        %691 = vset.pattern.permute.xlu0 0
        %692 = vperm.xlu0 %691, %v669
        %v693 = vpop.permute.xlu0 %692
        %vm694 = vcmp.eq.s32.totalorder %v672, 1
        %vm695 = vcmp.eq.s32.totalorder %v675, 1
        %vm696 = vcmp.eq.s32.totalorder %v678, 1
        %vm697 = vcmp.eq.s32.totalorder %v681, 1
        %vm698 = vcmp.eq.s32.totalorder %v684, 1
        %vm699 = vcmp.eq.s32.totalorder %v687, 1
        %vm700 = vcmp.eq.s32.totalorder %v690, 1
        %vm701 = vcmp.eq.s32.totalorder %v693, 1
        %v702 = vsel %vm694, %v566, %v494
        %v703 = vsel %vm694, %v567, %v495
        %v704 = vsel %vm694, %v568, %v496
        %v705 = vsel %vm694, %v569, %v497
        %v706 = vsel %vm694, %v570, %v498
        %v707 = vsel %vm694, %v571, %v499
        %v708 = vsel %vm694, %v572, %v500
        %v709 = vsel %vm694, %v573, %v501
        %v710 = vsel %vm695, %v574, %v502
        %v711 = vsel %vm695, %v575, %v503
        %v712 = vsel %vm695, %v576, %v504
        %v713 = vsel %vm695, %v577, %v505
        %v714 = vsel %vm695, %v578, %v506
        %v715 = vsel %vm695, %v579, %v507
        %v716 = vsel %vm695, %v580, %v508
        %v717 = vsel %vm695, %v581, %v509
        %v718 = vsel %vm696, %v582, %v510
        %v719 = vsel %vm696, %v583, %v511
        %v720 = vsel %vm696, %v584, %v512
        %v721 = vsel %vm696, %v585, %v513
        %v722 = vsel %vm696, %v586, %v514
        %v723 = vsel %vm696, %v587, %v515
        %v724 = vsel %vm696, %v588, %v516
        %v725 = vsel %vm696, %v589, %v517
        %v726 = vsel %vm697, %v590, %v518
        %v727 = vsel %vm697, %v591, %v519
        %v728 = vsel %vm697, %v592, %v520
        %v729 = vsel %vm697, %v593, %v521
        %v730 = vsel %vm697, %v594, %v522
        %v731 = vsel %vm697, %v595, %v523
        %v732 = vsel %vm697, %v596, %v524
        %v733 = vsel %vm697, %v597, %v525
        %v734 = vsel %vm698, %v598, %v526
        %v735 = vsel %vm698, %v599, %v527
        %v736 = vsel %vm698, %v600, %v528
        %v737 = vsel %vm698, %v601, %v529
        %v738 = vsel %vm698, %v602, %v530
        %v739 = vsel %vm698, %v603, %v531
        %v740 = vsel %vm698, %v604, %v532
        %v741 = vsel %vm698, %v605, %v533
        %v742 = vsel %vm699, %v606, %v534
        %v743 = vsel %vm699, %v607, %v535
        %v744 = vsel %vm699, %v608, %v536
        %v745 = vsel %vm699, %v609, %v537
        %v746 = vsel %vm699, %v610, %v538
        %v747 = vsel %vm699, %v611, %v539
        %v748 = vsel %vm699, %v612, %v540
        %v749 = vsel %vm699, %v613, %v541
        %v750 = vsel %vm700, %v614, %v542
        %v751 = vsel %vm700, %v615, %v543
        %v752 = vsel %vm700, %v616, %v544
        %v753 = vsel %vm700, %v617, %v545
        %v754 = vsel %vm700, %v618, %v546
        %v755 = vsel %vm700, %v619, %v547
        %v756 = vsel %vm700, %v620, %v548
        %v757 = vsel %vm700, %v621, %v549
        %v758 = vsel %vm701, %v622, %v550
        %v759 = vsel %vm701, %v623, %v551
        %v760 = vsel %vm701, %v624, %v552
        %v761 = vsel %vm701, %v625, %v553
        %v762 = vsel %vm701, %v626, %v554
        %v763 = vsel %vm701, %v627, %v555
        %v764 = vsel %vm701, %v628, %v556
        %v765 = vsel %vm701, %v629, %v557
        %vm766 = vcmp.eq.s32.totalorder %v260, 3
        %vm767 = vcmp.eq.s32.totalorder %v274, 3
        %vm768 = vcmp.eq.s32.totalorder %v282, 3
        %vm769 = vcmp.eq.s32.totalorder %v284, 3
        %vm770 = vcmp.eq.s32.totalorder %v267, 3
        %vm771 = vcmp.eq.s32.totalorder %v281, 3
        %vm772 = vcmp.eq.s32.totalorder %v283, 3
        %vm773 = vcmp.eq.s32.totalorder %v285, 3
        %v774 = vld [vmem:[%s233 + $0x3] sm:$0x1]
        %v775 = vld [vmem:[%s233 + $0xb] sm:$0x1]
        %v776 = vld [vmem:[%s233 + $0x13] sm:$0x1]
        %v777 = vld [vmem:[%s233 + $0x1b] sm:$0x1]
        %v778 = vld [vmem:[%s233 + $0x23] sm:$0x1]
        %v779 = vld [vmem:[%s233 + $0x2b] sm:$0x1]
        %v780 = vld [vmem:[%s233 + $0x33] sm:$0x1]
        %v781 = vld [vmem:[%s233 + $0x3b] sm:$0x1]
        %v782 = vld [vmem:[%s233 + $0x43] sm:$0x1]
        %v783 = vld [vmem:[%s233 + $0x4b] sm:$0x1]
        %v784 = vld [vmem:[%s233 + $0x53] sm:$0x1]
        %v785 = vld [vmem:[%s233 + $0x5b] sm:$0x1]
        %v786 = vld [vmem:[%s233 + $0x63] sm:$0x1]
        %v787 = vld [vmem:[%s233 + $0x6b] sm:$0x1]
        %v788 = vld [vmem:[%s233 + $0x73] sm:$0x1]
        %v789 = vld [vmem:[%s233 + $0x7b] sm:$0x1]
        %v790 = vld [vmem:[%s233 + $0x83] sm:$0x1]
        %v791 = vld [vmem:[%s233 + $0x8b] sm:$0x1]
        %v792 = vld [vmem:[%s233 + $0x93] sm:$0x1]
        %v793 = vld [vmem:[%s233 + $0x9b] sm:$0x1]
        %v794 = vld [vmem:[%s233 + $0xa3] sm:$0x1]
        %v795 = vld [vmem:[%s233 + $0xab] sm:$0x1]
        %v796 = vld [vmem:[%s233 + $0xb3] sm:$0x1]
        %v797 = vld [vmem:[%s233 + $0xbb] sm:$0x1]
        %v798 = vld [vmem:[%s233 + $0xc3] sm:$0x1]
        %v799 = vld [vmem:[%s233 + $0xcb] sm:$0x1]
        %v800 = vld [vmem:[%s233 + $0xd3] sm:$0x1]
        %v801 = vld [vmem:[%s233 + $0xdb] sm:$0x1]
        %v802 = vld [vmem:[%s233 + $0xe3] sm:$0x1]
        %v803 = vld [vmem:[%s233 + $0xeb] sm:$0x1]
        %v804 = vld [vmem:[%s233 + $0xf3] sm:$0x1]
        %v805 = vld [vmem:[%s233 + $0xfb] sm:$0x1]
        %v806 = vld [vmem:[%s233 + $0x103] sm:$0x1]
        %v807 = vld [vmem:[%s233 + $0x10b] sm:$0x1]
        %v808 = vld [vmem:[%s233 + $0x113] sm:$0x1]
        %v809 = vld [vmem:[%s233 + $0x11b] sm:$0x1]
        %v810 = vld [vmem:[%s233 + $0x123] sm:$0x1]
        %v811 = vld [vmem:[%s233 + $0x12b] sm:$0x1]
        %v812 = vld [vmem:[%s233 + $0x133] sm:$0x1]
        %v813 = vld [vmem:[%s233 + $0x13b] sm:$0x1]
        %v814 = vld [vmem:[%s233 + $0x143] sm:$0x1]
        %v815 = vld [vmem:[%s233 + $0x14b] sm:$0x1]
        %v816 = vld [vmem:[%s233 + $0x153] sm:$0x1]
        %v817 = vld [vmem:[%s233 + $0x15b] sm:$0x1]
        %v818 = vld [vmem:[%s233 + $0x163] sm:$0x1]
        %v819 = vld [vmem:[%s233 + $0x16b] sm:$0x1]
        %v820 = vld [vmem:[%s233 + $0x173] sm:$0x1]
        %v821 = vld [vmem:[%s233 + $0x17b] sm:$0x1]
        %v822 = vld [vmem:[%s233 + $0x183] sm:$0x1]
        %v823 = vld [vmem:[%s233 + $0x18b] sm:$0x1]
        %v824 = vld [vmem:[%s233 + $0x193] sm:$0x1]
        %v825 = vld [vmem:[%s233 + $0x19b] sm:$0x1]
        %v826 = vld [vmem:[%s233 + $0x1a3] sm:$0x1]
        %v827 = vld [vmem:[%s233 + $0x1ab] sm:$0x1]
        %v828 = vld [vmem:[%s233 + $0x1b3] sm:$0x1]
        %v829 = vld [vmem:[%s233 + $0x1bb] sm:$0x1]
        %v830 = vld [vmem:[%s233 + $0x1c3] sm:$0x1]
        %v831 = vld [vmem:[%s233 + $0x1cb] sm:$0x1]
        %v832 = vld [vmem:[%s233 + $0x1d3] sm:$0x1]
        %v833 = vld [vmem:[%s233 + $0x1db] sm:$0x1]
        %v834 = vld [vmem:[%s233 + $0x1e3] sm:$0x1]
        %v835 = vld [vmem:[%s233 + $0x1eb] sm:$0x1]
        %v836 = vld [vmem:[%s233 + $0x1f3] sm:$0x1]
        %v837 = vld [vmem:[%s233 + $0x1fb] sm:$0x1]
        %v838 = vsel %vm766, 1, 0
        %v839 = vsel %vm767, 1, 0
        %v840 = vsel %vm768, 1, 0
        %v841 = vsel %vm769, 1, 0
        %v842 = vsel %vm770, 1, 0
        %v843 = vsel %vm771, 1, 0
        %v844 = vsel %vm772, 1, 0
        %v845 = vsel %vm773, 1, 0
        %v846 = vlaneseq
        %v847 = vshrl.u32 %v846, 7
        %v848 = vsub.s32 0, %v847
        %v849 = vrot.slane %v838, %v848
        %v850 = vlaneseq
        %v851 = vshrl.u32 %v850, 7
        %v852 = vsub.s32 0, %v851
        %v853 = vrot.slane %v839, %v852
        %v854 = vlaneseq
        %v855 = vshrl.u32 %v854, 7
        %v856 = vsub.s32 0, %v855
        %v857 = vrot.slane %v840, %v856
        %v858 = vlaneseq
        %v859 = vshrl.u32 %v858, 7
        %v860 = vsub.s32 0, %v859
        %v861 = vrot.slane %v841, %v860
        %v862 = vlaneseq
        %v863 = vshrl.u32 %v862, 7
        %v864 = vsub.s32 0, %v863
        %v865 = vrot.slane %v842, %v864
        %v866 = vlaneseq
        %v867 = vshrl.u32 %v866, 7
        %v868 = vsub.s32 0, %v867
        %v869 = vrot.slane %v843, %v868
        %v870 = vlaneseq
        %v871 = vshrl.u32 %v870, 7
        %v872 = vsub.s32 0, %v871
        %v873 = vrot.slane %v844, %v872
        %v874 = vlaneseq
        %v875 = vshrl.u32 %v874, 7
        %v876 = vsub.s32 0, %v875
        %v877 = vrot.slane %v845, %v876
        %878 = vset.pattern.permute.xlu0 0
        %879 = vperm.xlu0 %878, %v849
        %v880 = vpop.permute.xlu0 %879
        %881 = vset.pattern.permute.xlu0 0
        %882 = vperm.xlu0 %881, %v853
        %v883 = vpop.permute.xlu0 %882
        %884 = vset.pattern.permute.xlu0 0
        %885 = vperm.xlu0 %884, %v857
        %v886 = vpop.permute.xlu0 %885
        %887 = vset.pattern.permute.xlu0 0
        %888 = vperm.xlu0 %887, %v861
        %v889 = vpop.permute.xlu0 %888
        %890 = vset.pattern.permute.xlu0 0
        %891 = vperm.xlu0 %890, %v865
        %v892 = vpop.permute.xlu0 %891
        %893 = vset.pattern.permute.xlu0 0
        %894 = vperm.xlu0 %893, %v869
        %v895 = vpop.permute.xlu0 %894
        %896 = vset.pattern.permute.xlu0 0
        %897 = vperm.xlu0 %896, %v873
        %v898 = vpop.permute.xlu0 %897
        %899 = vset.pattern.permute.xlu0 0
        %900 = vperm.xlu0 %899, %v877
        %v901 = vpop.permute.xlu0 %900
        %vm902 = vcmp.eq.s32.totalorder %v880, 1
        %vm903 = vcmp.eq.s32.totalorder %v883, 1
        %vm904 = vcmp.eq.s32.totalorder %v886, 1
        %vm905 = vcmp.eq.s32.totalorder %v889, 1
        %vm906 = vcmp.eq.s32.totalorder %v892, 1
        %vm907 = vcmp.eq.s32.totalorder %v895, 1
        %vm908 = vcmp.eq.s32.totalorder %v898, 1
        %vm909 = vcmp.eq.s32.totalorder %v901, 1
        %v910 = vsel %vm902, %v774, %v702
        %v911 = vsel %vm902, %v775, %v703
        %v912 = vsel %vm902, %v776, %v704
        %v913 = vsel %vm902, %v777, %v705
        %v914 = vsel %vm902, %v778, %v706
        %v915 = vsel %vm902, %v779, %v707
        %v916 = vsel %vm902, %v780, %v708
        %v917 = vsel %vm902, %v781, %v709
        %v918 = vsel %vm903, %v782, %v710
        %v919 = vsel %vm903, %v783, %v711
        %v920 = vsel %vm903, %v784, %v712
        %v921 = vsel %vm903, %v785, %v713
        %v922 = vsel %vm903, %v786, %v714
        %v923 = vsel %vm903, %v787, %v715
        %v924 = vsel %vm903, %v788, %v716
        %v925 = vsel %vm903, %v789, %v717
        %v926 = vsel %vm904, %v790, %v718
        %v927 = vsel %vm904, %v791, %v719
        %v928 = vsel %vm904, %v792, %v720
        %v929 = vsel %vm904, %v793, %v721
        %v930 = vsel %vm904, %v794, %v722
        %v931 = vsel %vm904, %v795, %v723
        %v932 = vsel %vm904, %v796, %v724
        %v933 = vsel %vm904, %v797, %v725
        %v934 = vsel %vm905, %v798, %v726
        %v935 = vsel %vm905, %v799, %v727
        %v936 = vsel %vm905, %v800, %v728
        %v937 = vsel %vm905, %v801, %v729
        %v938 = vsel %vm905, %v802, %v730
        %v939 = vsel %vm905, %v803, %v731
        %v940 = vsel %vm905, %v804, %v732
        %v941 = vsel %vm905, %v805, %v733
        %v942 = vsel %vm906, %v806, %v734
        %v943 = vsel %vm906, %v807, %v735
        %v944 = vsel %vm906, %v808, %v736
        %v945 = vsel %vm906, %v809, %v737
        %v946 = vsel %vm906, %v810, %v738
        %v947 = vsel %vm906, %v811, %v739
        %v948 = vsel %vm906, %v812, %v740
        %v949 = vsel %vm906, %v813, %v741
        %v950 = vsel %vm907, %v814, %v742
        %v951 = vsel %vm907, %v815, %v743
        %v952 = vsel %vm907, %v816, %v744
        %v953 = vsel %vm907, %v817, %v745
        %v954 = vsel %vm907, %v818, %v746
        %v955 = vsel %vm907, %v819, %v747
        %v956 = vsel %vm907, %v820, %v748
        %v957 = vsel %vm907, %v821, %v749
        %v958 = vsel %vm908, %v822, %v750
        %v959 = vsel %vm908, %v823, %v751
        %v960 = vsel %vm908, %v824, %v752
        %v961 = vsel %vm908, %v825, %v753
        %v962 = vsel %vm908, %v826, %v754
        %v963 = vsel %vm908, %v827, %v755
        %v964 = vsel %vm908, %v828, %v756
        %v965 = vsel %vm908, %v829, %v757
        %v966 = vsel %vm909, %v830, %v758
        %v967 = vsel %vm909, %v831, %v759
        %v968 = vsel %vm909, %v832, %v760
        %v969 = vsel %vm909, %v833, %v761
        %v970 = vsel %vm909, %v834, %v762
        %v971 = vsel %vm909, %v835, %v763
        %v972 = vsel %vm909, %v836, %v764
        %v973 = vsel %vm909, %v837, %v765
        %vm974 = vcmp.eq.s32.totalorder %v260, 4
        %vm975 = vcmp.eq.s32.totalorder %v274, 4
        %vm976 = vcmp.eq.s32.totalorder %v282, 4
        %vm977 = vcmp.eq.s32.totalorder %v284, 4
        %vm978 = vcmp.eq.s32.totalorder %v267, 4
        %vm979 = vcmp.eq.s32.totalorder %v281, 4
        %vm980 = vcmp.eq.s32.totalorder %v283, 4
        %vm981 = vcmp.eq.s32.totalorder %v285, 4
        %v982 = vld [vmem:[%s233 + $0x4] sm:$0x1]
        %v983 = vld [vmem:[%s233 + $0xc] sm:$0x1]
        %v984 = vld [vmem:[%s233 + $0x14] sm:$0x1]
        %v985 = vld [vmem:[%s233 + $0x1c] sm:$0x1]
        %v986 = vld [vmem:[%s233 + $0x24] sm:$0x1]
        %v987 = vld [vmem:[%s233 + $0x2c] sm:$0x1]
        %v988 = vld [vmem:[%s233 + $0x34] sm:$0x1]
        %v989 = vld [vmem:[%s233 + $0x3c] sm:$0x1]
        %v990 = vld [vmem:[%s233 + $0x44] sm:$0x1]
        %v991 = vld [vmem:[%s233 + $0x4c] sm:$0x1]
        %v992 = vld [vmem:[%s233 + $0x54] sm:$0x1]
        %v993 = vld [vmem:[%s233 + $0x5c] sm:$0x1]
        %v994 = vld [vmem:[%s233 + $0x64] sm:$0x1]
        %v995 = vld [vmem:[%s233 + $0x6c] sm:$0x1]
        %v996 = vld [vmem:[%s233 + $0x74] sm:$0x1]
        %v997 = vld [vmem:[%s233 + $0x7c] sm:$0x1]
        %v998 = vld [vmem:[%s233 + $0x84] sm:$0x1]
        %v999 = vld [vmem:[%s233 + $0x8c] sm:$0x1]
        %v1000 = vld [vmem:[%s233 + $0x94] sm:$0x1]
        %v1001 = vld [vmem:[%s233 + $0x9c] sm:$0x1]
        %v1002 = vld [vmem:[%s233 + $0xa4] sm:$0x1]
        %v1003 = vld [vmem:[%s233 + $0xac] sm:$0x1]
        %v1004 = vld [vmem:[%s233 + $0xb4] sm:$0x1]
        %v1005 = vld [vmem:[%s233 + $0xbc] sm:$0x1]
        %v1006 = vld [vmem:[%s233 + $0xc4] sm:$0x1]
        %v1007 = vld [vmem:[%s233 + $0xcc] sm:$0x1]
        %v1008 = vld [vmem:[%s233 + $0xd4] sm:$0x1]
        %v1009 = vld [vmem:[%s233 + $0xdc] sm:$0x1]
        %v1010 = vld [vmem:[%s233 + $0xe4] sm:$0x1]
        %v1011 = vld [vmem:[%s233 + $0xec] sm:$0x1]
        %v1012 = vld [vmem:[%s233 + $0xf4] sm:$0x1]
        %v1013 = vld [vmem:[%s233 + $0xfc] sm:$0x1]
        %v1014 = vld [vmem:[%s233 + $0x104] sm:$0x1]
        %v1015 = vld [vmem:[%s233 + $0x10c] sm:$0x1]
        %v1016 = vld [vmem:[%s233 + $0x114] sm:$0x1]
        %v1017 = vld [vmem:[%s233 + $0x11c] sm:$0x1]
        %v1018 = vld [vmem:[%s233 + $0x124] sm:$0x1]
        %v1019 = vld [vmem:[%s233 + $0x12c] sm:$0x1]
        %v1020 = vld [vmem:[%s233 + $0x134] sm:$0x1]
        %v1021 = vld [vmem:[%s233 + $0x13c] sm:$0x1]
        %v1022 = vld [vmem:[%s233 + $0x144] sm:$0x1]
        %v1023 = vld [vmem:[%s233 + $0x14c] sm:$0x1]
        %v1024 = vld [vmem:[%s233 + $0x154] sm:$0x1]
        %v1025 = vld [vmem:[%s233 + $0x15c] sm:$0x1]
        %v1026 = vld [vmem:[%s233 + $0x164] sm:$0x1]
        %v1027 = vld [vmem:[%s233 + $0x16c] sm:$0x1]
        %v1028 = vld [vmem:[%s233 + $0x174] sm:$0x1]
        %v1029 = vld [vmem:[%s233 + $0x17c] sm:$0x1]
        %v1030 = vld [vmem:[%s233 + $0x184] sm:$0x1]
        %v1031 = vld [vmem:[%s233 + $0x18c] sm:$0x1]
        %v1032 = vld [vmem:[%s233 + $0x194] sm:$0x1]
        %v1033 = vld [vmem:[%s233 + $0x19c] sm:$0x1]
        %v1034 = vld [vmem:[%s233 + $0x1a4] sm:$0x1]
        %v1035 = vld [vmem:[%s233 + $0x1ac] sm:$0x1]
        %v1036 = vld [vmem:[%s233 + $0x1b4] sm:$0x1]
        %v1037 = vld [vmem:[%s233 + $0x1bc] sm:$0x1]
        %v1038 = vld [vmem:[%s233 + $0x1c4] sm:$0x1]
        %v1039 = vld [vmem:[%s233 + $0x1cc] sm:$0x1]
        %v1040 = vld [vmem:[%s233 + $0x1d4] sm:$0x1]
        %v1041 = vld [vmem:[%s233 + $0x1dc] sm:$0x1]
        %v1042 = vld [vmem:[%s233 + $0x1e4] sm:$0x1]
        %v1043 = vld [vmem:[%s233 + $0x1ec] sm:$0x1]
        %v1044 = vld [vmem:[%s233 + $0x1f4] sm:$0x1]
        %v1045 = vld [vmem:[%s233 + $0x1fc] sm:$0x1]
        %v1046 = vsel %vm974, 1, 0
        %v1047 = vsel %vm975, 1, 0
        %v1048 = vsel %vm976, 1, 0
        %v1049 = vsel %vm977, 1, 0
        %v1050 = vsel %vm978, 1, 0
        %v1051 = vsel %vm979, 1, 0
        %v1052 = vsel %vm980, 1, 0
        %v1053 = vsel %vm981, 1, 0
        %v1054 = vlaneseq
        %v1055 = vshrl.u32 %v1054, 7
        %v1056 = vsub.s32 0, %v1055
        %v1057 = vrot.slane %v1046, %v1056
        %v1058 = vlaneseq
        %v1059 = vshrl.u32 %v1058, 7
        %v1060 = vsub.s32 0, %v1059
        %v1061 = vrot.slane %v1047, %v1060
        %v1062 = vlaneseq
        %v1063 = vshrl.u32 %v1062, 7
        %v1064 = vsub.s32 0, %v1063
        %v1065 = vrot.slane %v1048, %v1064
        %v1066 = vlaneseq
        %v1067 = vshrl.u32 %v1066, 7
        %v1068 = vsub.s32 0, %v1067
        %v1069 = vrot.slane %v1049, %v1068
        %v1070 = vlaneseq
        %v1071 = vshrl.u32 %v1070, 7
        %v1072 = vsub.s32 0, %v1071
        %v1073 = vrot.slane %v1050, %v1072
        %v1074 = vlaneseq
        %v1075 = vshrl.u32 %v1074, 7
        %v1076 = vsub.s32 0, %v1075
        %v1077 = vrot.slane %v1051, %v1076
        %v1078 = vlaneseq
        %v1079 = vshrl.u32 %v1078, 7
        %v1080 = vsub.s32 0, %v1079
        %v1081 = vrot.slane %v1052, %v1080
        %v1082 = vlaneseq
        %v1083 = vshrl.u32 %v1082, 7
        %v1084 = vsub.s32 0, %v1083
        %v1085 = vrot.slane %v1053, %v1084
        %1086 = vset.pattern.permute.xlu0 0
        %1087 = vperm.xlu0 %1086, %v1057
        %v1088 = vpop.permute.xlu0 %1087
        %1089 = vset.pattern.permute.xlu0 0
        %1090 = vperm.xlu0 %1089, %v1061
        %v1091 = vpop.permute.xlu0 %1090
        %1092 = vset.pattern.permute.xlu0 0
        %1093 = vperm.xlu0 %1092, %v1065
        %v1094 = vpop.permute.xlu0 %1093
        %1095 = vset.pattern.permute.xlu0 0
        %1096 = vperm.xlu0 %1095, %v1069
        %v1097 = vpop.permute.xlu0 %1096
        %1098 = vset.pattern.permute.xlu0 0
        %1099 = vperm.xlu0 %1098, %v1073
        %v1100 = vpop.permute.xlu0 %1099
        %1101 = vset.pattern.permute.xlu0 0
        %1102 = vperm.xlu0 %1101, %v1077
        %v1103 = vpop.permute.xlu0 %1102
        %1104 = vset.pattern.permute.xlu0 0
        %1105 = vperm.xlu0 %1104, %v1081
        %v1106 = vpop.permute.xlu0 %1105
        %1107 = vset.pattern.permute.xlu0 0
        %1108 = vperm.xlu0 %1107, %v1085
        %v1109 = vpop.permute.xlu0 %1108
        %vm1110 = vcmp.eq.s32.totalorder %v1088, 1
        %vm1111 = vcmp.eq.s32.totalorder %v1091, 1
        %vm1112 = vcmp.eq.s32.totalorder %v1094, 1
        %vm1113 = vcmp.eq.s32.totalorder %v1097, 1
        %vm1114 = vcmp.eq.s32.totalorder %v1100, 1
        %vm1115 = vcmp.eq.s32.totalorder %v1103, 1
        %vm1116 = vcmp.eq.s32.totalorder %v1106, 1
        %vm1117 = vcmp.eq.s32.totalorder %v1109, 1
        %v1118 = vsel %vm1110, %v982, %v910
        %v1119 = vsel %vm1110, %v983, %v911
        %v1120 = vsel %vm1110, %v984, %v912
        %v1121 = vsel %vm1110, %v985, %v913
        %v1122 = vsel %vm1110, %v986, %v914
        %v1123 = vsel %vm1110, %v987, %v915
        %v1124 = vsel %vm1110, %v988, %v916
        %v1125 = vsel %vm1110, %v989, %v917
        %v1126 = vsel %vm1111, %v990, %v918
        %v1127 = vsel %vm1111, %v991, %v919
        %v1128 = vsel %vm1111, %v992, %v920
        %v1129 = vsel %vm1111, %v993, %v921
        %v1130 = vsel %vm1111, %v994, %v922
        %v1131 = vsel %vm1111, %v995, %v923
        %v1132 = vsel %vm1111, %v996, %v924
        %v1133 = vsel %vm1111, %v997, %v925
        %v1134 = vsel %vm1112, %v998, %v926
        %v1135 = vsel %vm1112, %v999, %v927
        %v1136 = vsel %vm1112, %v1000, %v928
        %v1137 = vsel %vm1112, %v1001, %v929
        %v1138 = vsel %vm1112, %v1002, %v930
        %v1139 = vsel %vm1112, %v1003, %v931
        %v1140 = vsel %vm1112, %v1004, %v932
        %v1141 = vsel %vm1112, %v1005, %v933
        %v1142 = vsel %vm1113, %v1006, %v934
        %v1143 = vsel %vm1113, %v1007, %v935
        %v1144 = vsel %vm1113, %v1008, %v936
        %v1145 = vsel %vm1113, %v1009, %v937
        %v1146 = vsel %vm1113, %v1010, %v938
        %v1147 = vsel %vm1113, %v1011, %v939
        %v1148 = vsel %vm1113, %v1012, %v940
        %v1149 = vsel %vm1113, %v1013, %v941
        %v1150 = vsel %vm1114, %v1014, %v942
        %v1151 = vsel %vm1114, %v1015, %v943
        %v1152 = vsel %vm1114, %v1016, %v944
        %v1153 = vsel %vm1114, %v1017, %v945
        %v1154 = vsel %vm1114, %v1018, %v946
        %v1155 = vsel %vm1114, %v1019, %v947
        %v1156 = vsel %vm1114, %v1020, %v948
        %v1157 = vsel %vm1114, %v1021, %v949
        %v1158 = vsel %vm1115, %v1022, %v950
        %v1159 = vsel %vm1115, %v1023, %v951
        %v1160 = vsel %vm1115, %v1024, %v952
        %v1161 = vsel %vm1115, %v1025, %v953
        %v1162 = vsel %vm1115, %v1026, %v954
        %v1163 = vsel %vm1115, %v1027, %v955
        %v1164 = vsel %vm1115, %v1028, %v956
        %v1165 = vsel %vm1115, %v1029, %v957
        %v1166 = vsel %vm1116, %v1030, %v958
        %v1167 = vsel %vm1116, %v1031, %v959
        %v1168 = vsel %vm1116, %v1032, %v960
        %v1169 = vsel %vm1116, %v1033, %v961
        %v1170 = vsel %vm1116, %v1034, %v962
        %v1171 = vsel %vm1116, %v1035, %v963
        %v1172 = vsel %vm1116, %v1036, %v964
        %v1173 = vsel %vm1116, %v1037, %v965
        %v1174 = vsel %vm1117, %v1038, %v966
        %v1175 = vsel %vm1117, %v1039, %v967
        %v1176 = vsel %vm1117, %v1040, %v968
        %v1177 = vsel %vm1117, %v1041, %v969
        %v1178 = vsel %vm1117, %v1042, %v970
        %v1179 = vsel %vm1117, %v1043, %v971
        %v1180 = vsel %vm1117, %v1044, %v972
        %v1181 = vsel %vm1117, %v1045, %v973
        %v1182 = vld [vmem:[%s3] sm:$0xff]
        %v1183 = vld [vmem:[%s3 + $0x8] sm:$0xff]
        %v1184 = vld [vmem:[%s3 + $0x10] sm:$0xff]
        %v1185 = vld [vmem:[%s3 + $0x18] sm:$0xff]
        %v1250 = vrot.slane %v1119, 7
        %vm1251 = vcmask 1041409
        %v1252 = vsel %vm1251, %v1250, %v1118
        %v1253 = vrot.slane %v1120, 6
        %vm1254 = vcmask 1042434
        %v1255 = vsel %vm1254, %v1253, %v1252
        %v1256 = vrot.slane %v1121, 5
        %vm1257 = vcmask 1043459
        %v1258 = vsel %vm1257, %v1256, %v1255
        %v1259 = vrot.slane %v1122, 4
        %vm1260 = vcmask 1044484
        %v1261 = vsel %vm1260, %v1259, %v1258
        %v1262 = vrot.slane %v1123, 3
        %vm1263 = vcmask 1045509
        %v1264 = vsel %vm1263, %v1262, %v1261
        %v1265 = vrot.slane %v1124, 2
        %vm1266 = vcmask 1046534
        %v1267 = vsel %vm1266, %v1265, %v1264
        %v1268 = vrot.slane %v1125, 1
        %vm1269 = vcmask 1047559
        %v1270 = vsel %vm1269, %v1268, %v1267
        %v1271 = vrot.slane %v1127, 7
        %v1272 = vsel %vm1251, %v1271, %v1126
        %v1273 = vrot.slane %v1128, 6
        %v1274 = vsel %vm1254, %v1273, %v1272
        %v1275 = vrot.slane %v1129, 5
        %v1276 = vsel %vm1257, %v1275, %v1274
        %v1277 = vrot.slane %v1130, 4
        %v1278 = vsel %vm1260, %v1277, %v1276
        %v1279 = vrot.slane %v1131, 3
        %v1280 = vsel %vm1263, %v1279, %v1278
        %v1281 = vrot.slane %v1132, 2
        %v1282 = vsel %vm1266, %v1281, %v1280
        %v1283 = vrot.slane %v1133, 1
        %v1284 = vsel %vm1269, %v1283, %v1282
        %v1285 = vrot.slane %v1135, 7
        %v1286 = vsel %vm1251, %v1285, %v1134
        %v1287 = vrot.slane %v1136, 6
        %v1288 = vsel %vm1254, %v1287, %v1286
        %v1289 = vrot.slane %v1137, 5
        %v1290 = vsel %vm1257, %v1289, %v1288
        %v1291 = vrot.slane %v1138, 4
        %v1292 = vsel %vm1260, %v1291, %v1290
        %v1293 = vrot.slane %v1139, 3
        %v1294 = vsel %vm1263, %v1293, %v1292
        %v1295 = vrot.slane %v1140, 2
        %v1296 = vsel %vm1266, %v1295, %v1294
        %v1297 = vrot.slane %v1141, 1
        %v1298 = vsel %vm1269, %v1297, %v1296
        %v1299 = vrot.slane %v1143, 7
        %v1300 = vsel %vm1251, %v1299, %v1142
        %v1301 = vrot.slane %v1144, 6
        %v1302 = vsel %vm1254, %v1301, %v1300
        %v1303 = vrot.slane %v1145, 5
        %v1304 = vsel %vm1257, %v1303, %v1302
        %v1305 = vrot.slane %v1146, 4
        %v1306 = vsel %vm1260, %v1305, %v1304
        %v1307 = vrot.slane %v1147, 3
        %v1308 = vsel %vm1263, %v1307, %v1306
        %v1309 = vrot.slane %v1148, 2
        %v1310 = vsel %vm1266, %v1309, %v1308
        %v1311 = vrot.slane %v1149, 1
        %v1312 = vsel %vm1269, %v1311, %v1310
        %v1313 = vrot.slane %v1151, 7
        %v1314 = vsel %vm1251, %v1313, %v1150
        %v1315 = vrot.slane %v1152, 6
        %v1316 = vsel %vm1254, %v1315, %v1314
        %v1317 = vrot.slane %v1153, 5
        %v1318 = vsel %vm1257, %v1317, %v1316
        %v1319 = vrot.slane %v1154, 4
        %v1320 = vsel %vm1260, %v1319, %v1318
        %v1321 = vrot.slane %v1155, 3
        %v1322 = vsel %vm1263, %v1321, %v1320
        %v1323 = vrot.slane %v1156, 2
        %v1324 = vsel %vm1266, %v1323, %v1322
        %v1325 = vrot.slane %v1157, 1
        %v1326 = vsel %vm1269, %v1325, %v1324
        %v1327 = vrot.slane %v1159, 7
        %v1328 = vsel %vm1251, %v1327, %v1158
        %v1329 = vrot.slane %v1160, 6
        %v1330 = vsel %vm1254, %v1329, %v1328
        %v1331 = vrot.slane %v1161, 5
        %v1332 = vsel %vm1257, %v1331, %v1330
        %v1333 = vrot.slane %v1162, 4
        %v1334 = vsel %vm1260, %v1333, %v1332
        %v1335 = vrot.slane %v1163, 3
        %v1336 = vsel %vm1263, %v1335, %v1334
        %v1337 = vrot.slane %v1164, 2
        %v1338 = vsel %vm1266, %v1337, %v1336
        %v1339 = vrot.slane %v1165, 1
        %v1340 = vsel %vm1269, %v1339, %v1338
        %v1341 = vrot.slane %v1167, 7
        %v1342 = vsel %vm1251, %v1341, %v1166
        %v1343 = vrot.slane %v1168, 6
        %v1344 = vsel %vm1254, %v1343, %v1342
        %v1345 = vrot.slane %v1169, 5
        %v1346 = vsel %vm1257, %v1345, %v1344
        %v1347 = vrot.slane %v1170, 4
        %v1348 = vsel %vm1260, %v1347, %v1346
        %v1349 = vrot.slane %v1171, 3
        %v1350 = vsel %vm1263, %v1349, %v1348
        %v1351 = vrot.slane %v1172, 2
        %v1352 = vsel %vm1266, %v1351, %v1350
        %v1353 = vrot.slane %v1173, 1
        %v1354 = vsel %vm1269, %v1353, %v1352
        %v1355 = vrot.slane %v1175, 7
        %v1356 = vsel %vm1251, %v1355, %v1174
        %v1357 = vrot.slane %v1176, 6
        %v1358 = vsel %vm1254, %v1357, %v1356
        %v1359 = vrot.slane %v1177, 5
        %v1360 = vsel %vm1257, %v1359, %v1358
        %v1361 = vrot.slane %v1178, 4
        %v1362 = vsel %vm1260, %v1361, %v1360
        %v1363 = vrot.slane %v1179, 3
        %v1364 = vsel %vm1263, %v1363, %v1362
        %v1365 = vrot.slane %v1180, 2
        %v1366 = vsel %vm1266, %v1365, %v1364
        %v1367 = vrot.slane %v1181, 1
        %v1368 = vsel %vm1269, %v1367, %v1366
        %vm1369 = vcmask 261120
        %v1370 = vsel %vm1369, %v1270, 0
        %v1372 = vsel %vm1369, %v1284, 0
        %v1374 = vsel %vm1369, %v1298, 0
        %v1376 = vsel %vm1369, %v1312, 0
        %v1378 = vsel %vm1369, %v1326, 0
        %v1380 = vsel %vm1369, %v1340, 0
        %v1382 = vsel %vm1369, %v1354, 0
        %v1384 = vsel %vm1369, %v1368, 0
        %1386 = vmatprep.subr.mxu0 0.0
        %1387 = vmatpush1.msra.mxu0 %v1182
        %1388 = vmatprep.subr.mxu0 0.0
        %1389 = vmatpush1.msra.mxu0 %v1183
        %1390 = vmatprep.subr.mxu0 0.0
        %1391 = vmatpush1.msra.mxu0 %v1184
        %1392 = vmatprep.subr.mxu0 0.0
        %1393 = vmatpush1.msra.mxu0 %v1185
        %1394 = vmatprep.subr.mxu0 0.0
        %1395 = vmatpush1.msra.mxu0 0.0
        %1396 = vmatprep.subr.mxu0 0.0
        %1397 = vmatpush1.msra.mxu0 0.0
        %1398 = vmatprep.subr.mxu0 0.0
        %1399 = vmatpush1.msra.mxu0 0.0
        %1400 = vmatprep.subr.mxu0 0.0
        %1401 = vmatpush1.msra.mxu0 0.0
        %1402 = vmatprep.subr.mxu0 0.0
        %1403 = vmatpush1.msra.mxu0 0.0
        %1404 = vmatprep.subr.mxu0 0.0
        %1405 = vmatpush1.msra.mxu0 0.0
        %1406 = vmatprep.subr.mxu0 0.0
        %1407 = vmatpush1.msra.mxu0 0.0
        %1408 = vmatprep.subr.mxu0 0.0
        %1409 = vmatpush1.msra.mxu0 0.0
        %1410 = vmatprep.subr.mxu0 0.0
        %1411 = vmatpush1.msra.mxu0 0.0
        %1412 = vmatprep.subr.mxu0 0.0
        %1413 = vmatpush1.msra.mxu0 0.0
        %1414 = vmatprep.subr.mxu0 0.0
        %1415 = vmatpush1.msra.mxu0 0.0
        %1416 = vmatprep.subr.mxu0 0.0
        %1417 = vmatpush1.msra.mxu0 0.0
        %1418 = vmatprep.subr.mxu0 0.0
        %1419 = vmatpush1.msra.mxu0 0.0
        %1420 = vmatprep.subr.mxu0 0.0
        %1421 = vmatpush1.msra.mxu0 0.0
        %1422 = vmatprep.subr.mxu0 0.0
        %1423 = vmatpush1.msra.mxu0 0.0
        %1424 = vmatprep.subr.mxu0 0.0
        %1425 = vmatpush1.msra.mxu0 0.0
        %1426 = vmatprep.subr.mxu0 0.0
        %1427 = vmatpush1.msra.mxu0 0.0
        %1428 = vmatprep.subr.mxu0 0.0
        %1429 = vmatpush1.msra.mxu0 0.0
        %1430 = vmatprep.subr.mxu0 0.0
        %1431 = vmatpush1.msra.mxu0 0.0
        %1432 = vmatprep.subr.mxu0 0.0
        %1433 = vmatpush1.msra.mxu0 0.0
        %1434 = vmatprep.subr.mxu0 0.0
        %1435 = vmatpush1.msra.mxu0 0.0
        %1436 = vmatprep.subr.mxu0 0.0
        %1437 = vmatpush1.msra.mxu0 0.0
        %1438 = vmatprep.subr.mxu0 0.0
        %1439 = vmatpush1.msra.mxu0 0.0
        %1440 = vmatprep.subr.mxu0 0.0
        %1441 = vmatpush1.msra.mxu0 0.0
        %1442 = vmatprep.subr.mxu0 0.0
        %1443 = vmatpush1.msra.mxu0 0.0
        %1444 = vmatprep.subr.mxu0 0.0
        %1445 = vmatpush1.msra.mxu0 0.0
        %1446 = vmatprep.subr.mxu0 0.0
        %1447 = vmatpush1.msra.mxu0 0.0
        %1448 = vmatprep.subr.mxu0 0.0
        %1449 = vmatpush1.msra.mxu0 0.0
        %1450 = vmatprep.mubr.f32.mxu0 0.0
        %1451 = vmatmul.mubr.f32.gmra.mrb[0].mxu0 %v1370
        %v1452 = vpop.f32.mrb[0].mxu0
        %v1453 = vadd.f32 0.0, %v1452
        %v1454 = vpop.f32.mrb[0].mxu0
        %1455 = vmatprep.mubr.f32.mxu0 0.0
        %1456 = vmatmul.mubr.f32.gmra.mrb[0].mxu0 %v1372
        %v1457 = vpop.f32.mrb[0].mxu0
        %v1458 = vadd.f32 0.0, %v1457
        %v1459 = vpop.f32.mrb[0].mxu0
        %1460 = vmatprep.mubr.f32.mxu0 0.0
        %1461 = vmatmul.mubr.f32.gmra.mrb[0].mxu0 %v1374
        %v1462 = vpop.f32.mrb[0].mxu0
        %v1463 = vadd.f32 0.0, %v1462
        %v1464 = vpop.f32.mrb[0].mxu0
        %1465 = vmatprep.mubr.f32.mxu0 0.0
        %1466 = vmatmul.mubr.f32.gmra.mrb[0].mxu0 %v1376
        %v1467 = vpop.f32.mrb[0].mxu0
        %v1468 = vadd.f32 0.0, %v1467
        %v1469 = vpop.f32.mrb[0].mxu0
        %1470 = vmatprep.mubr.f32.mxu0 0.0
        %1471 = vmatmul.mubr.f32.gmra.mrb[0].mxu0 %v1378
        %v1472 = vpop.f32.mrb[0].mxu0
        %v1473 = vadd.f32 0.0, %v1472
        %v1474 = vpop.f32.mrb[0].mxu0
        %1475 = vmatprep.mubr.f32.mxu0 0.0
        %1476 = vmatmul.mubr.f32.gmra.mrb[0].mxu0 %v1380
        %v1477 = vpop.f32.mrb[0].mxu0
        %v1478 = vadd.f32 0.0, %v1477
        %v1479 = vpop.f32.mrb[0].mxu0
        %1480 = vmatprep.mubr.f32.mxu0 0.0
        %1481 = vmatmul.mubr.f32.gmra.mrb[0].mxu0 %v1382
        %v1482 = vpop.f32.mrb[0].mxu0
        %v1483 = vadd.f32 0.0, %v1482
        %v1484 = vpop.f32.mrb[0].mxu0
        %1485 = vmatprep.mubr.f32.mxu0 0.0
        %1486 = vmatmul.mubr.f32.gmra.mrb[0].mxu0 %v1384
        %v1487 = vpop.f32.mrb[0].mxu0
        %v1488 = vadd.f32 0.0, %v1487
        %v1489 = vpop.f32.mrb[0].mxu0
        %1490 = vdwg.mxu0
        %v1492 = vcombine.high %v236, %v236
        %v1494 = vunpack.c.l.s4 1966171168
        %v1495 = vunpack.c.0.s8 %v1494
        %v1496 = vlaneseq
        %v1497 = vshrl.u32 %v1496, 7
        %v1498 = vsub.s32 %v1495, %v1497
        %v1499 = vrot.slane %v236, %v1498
        %v1501 = vunpack.c.l.s4 1966171168
        %v1502 = vunpack.c.0.s8 %v1501
        %v1503 = vlaneseq
        %v1504 = vshrl.u32 %v1503, 7
        %v1505 = vsub.s32 %v1502, %v1504
        %v1506 = vrot.slane %v1492, %v1505
        %v1507 = vcombine.high %v1499, %v1499
        %v1508 = vcombine.high %v1506, %v1506
        %v1510 = vunpack.c.l.s4 1966171168
        %v1511 = vunpack.c.0.s8 %v1510
        %v1512 = vlaneseq
        %v1513 = vshrl.u32 %v1512, 7
        %v1514 = vsub.s32 %v1511, %v1513
        %v1515 = vrot.slane %v1499, %v1514
        %v1517 = vunpack.c.l.s4 1966171168
        %v1518 = vunpack.c.0.s8 %v1517
        %v1519 = vlaneseq
        %v1520 = vshrl.u32 %v1519, 7
        %v1521 = vsub.s32 %v1518, %v1520
        %v1522 = vrot.slane %v1506, %v1521
        %v1524 = vunpack.c.l.s4 1966171168
        %v1525 = vunpack.c.0.s8 %v1524
        %v1526 = vlaneseq
        %v1527 = vshrl.u32 %v1526, 7
        %v1528 = vsub.s32 %v1525, %v1527
        %v1529 = vrot.slane %v1507, %v1528
        %v1531 = vunpack.c.l.s4 1966171168
        %v1532 = vunpack.c.0.s8 %v1531
        %v1533 = vlaneseq
        %v1534 = vshrl.u32 %v1533, 7
        %v1535 = vsub.s32 %v1532, %v1534
        %v1536 = vrot.slane %v1508, %v1535
        %v1537 = vcombine.high %v1515, %v1515
        %v1538 = vcombine.high %v1522, %v1522
        %v1539 = vcombine.high %v1529, %v1529
        %v1540 = vcombine.high %v1536, %v1536
        %v1541 = vlaneseq
        %v1542 = vshrl.u32 %v1541, 7
        %v1543 = vsub.s32 0, %v1542
        %v1544 = vrot.slane %v1515, %v1543
        %v1545 = vlaneseq
        %v1546 = vshrl.u32 %v1545, 7
        %v1547 = vsub.s32 0, %v1546
        %v1548 = vrot.slane %v1529, %v1547
        %v1549 = vlaneseq
        %v1550 = vshrl.u32 %v1549, 7
        %v1551 = vsub.s32 0, %v1550
        %v1552 = vrot.slane %v1537, %v1551
        %v1553 = vlaneseq
        %v1554 = vshrl.u32 %v1553, 7
        %v1555 = vsub.s32 0, %v1554
        %v1556 = vrot.slane %v1539, %v1555
        %v1557 = vlaneseq
        %v1558 = vshrl.u32 %v1557, 7
        %v1559 = vsub.s32 0, %v1558
        %v1560 = vrot.slane %v1522, %v1559
        %v1561 = vlaneseq
        %v1562 = vshrl.u32 %v1561, 7
        %v1563 = vsub.s32 0, %v1562
        %v1564 = vrot.slane %v1536, %v1563
        %v1565 = vlaneseq
        %v1566 = vshrl.u32 %v1565, 7
        %v1567 = vsub.s32 0, %v1566
        %v1568 = vrot.slane %v1538, %v1567
        %v1569 = vlaneseq
        %v1570 = vshrl.u32 %v1569, 7
        %v1571 = vsub.s32 0, %v1570
        %v1572 = vrot.slane %v1540, %v1571
        %v1581 = vadd.f32 %v1453, %v1544
        %v1582 = vadd.f32 %v1458, %v1548
        %v1583 = vadd.f32 %v1463, %v1552
        %v1584 = vadd.f32 %v1468, %v1556
        %v1585 = vadd.f32 %v1473, %v1560
        %v1586 = vadd.f32 %v1478, %v1564
        %v1587 = vadd.f32 %v1483, %v1568
        %v1588 = vadd.f32 %v1488, %v1572
        %v1589 = vcombine.low %v1581, %v1583
        %v1590 = vcombine.high %v1581, %v1583
        %v1592 = vunpack.c.l.s4 1983009808
        %v1593 = vunpack.c.0.s8 %v1592
        %v1594 = vlaneseq
        %v1595 = vshrl.u32 %v1594, 7
        %v1596 = vsub.s32 %v1593, %v1595
        %v1597 = vrot.slane %v1589, %v1596
        %v1599 = vunpack.c.l.s4 1983009808
        %v1600 = vunpack.c.0.s8 %v1599
        %v1601 = vlaneseq
        %v1602 = vshrl.u32 %v1601, 7
        %v1603 = vsub.s32 %v1600, %v1602
        %v1604 = vrot.slane %v1590, %v1603
        %v1605 = vcombine.low %v1582, %v1584
        %v1606 = vcombine.high %v1582, %v1584
        %v1608 = vunpack.c.l.s4 1983009808
        %v1609 = vunpack.c.0.s8 %v1608
        %v1610 = vlaneseq
        %v1611 = vshrl.u32 %v1610, 7
        %v1612 = vsub.s32 %v1609, %v1611
        %v1613 = vrot.slane %v1605, %v1612
        %v1615 = vunpack.c.l.s4 1983009808
        %v1616 = vunpack.c.0.s8 %v1615
        %v1617 = vlaneseq
        %v1618 = vshrl.u32 %v1617, 7
        %v1619 = vsub.s32 %v1616, %v1618
        %v1620 = vrot.slane %v1606, %v1619
        %v1621 = vcombine.low %v1585, %v1587
        %v1622 = vcombine.high %v1585, %v1587
        %v1624 = vunpack.c.l.s4 1983009808
        %v1625 = vunpack.c.0.s8 %v1624
        %v1626 = vlaneseq
        %v1627 = vshrl.u32 %v1626, 7
        %v1628 = vsub.s32 %v1625, %v1627
        %v1629 = vrot.slane %v1621, %v1628
        %v1631 = vunpack.c.l.s4 1983009808
        %v1632 = vunpack.c.0.s8 %v1631
        %v1633 = vlaneseq
        %v1634 = vshrl.u32 %v1633, 7
        %v1635 = vsub.s32 %v1632, %v1634
        %v1636 = vrot.slane %v1622, %v1635
        %v1637 = vcombine.low %v1586, %v1588
        %v1638 = vcombine.high %v1586, %v1588
        %v1640 = vunpack.c.l.s4 1983009808
        %v1641 = vunpack.c.0.s8 %v1640
        %v1642 = vlaneseq
        %v1643 = vshrl.u32 %v1642, 7
        %v1644 = vsub.s32 %v1641, %v1643
        %v1645 = vrot.slane %v1637, %v1644
        %v1647 = vunpack.c.l.s4 1983009808
        %v1648 = vunpack.c.0.s8 %v1647
        %v1649 = vlaneseq
        %v1650 = vshrl.u32 %v1649, 7
        %v1651 = vsub.s32 %v1648, %v1650
        %v1652 = vrot.slane %v1638, %v1651
        %v1653 = vcombine.low %v1597, %v1613
        %v1654 = vcombine.high %v1597, %v1613
        %v1656 = vunpack.c.l.s4 1934713408
        %v1657 = vunpack.c.0.s8 %v1656
        %v1658 = vlaneseq
        %v1659 = vshrl.u32 %v1658, 7
        %v1660 = vsub.s32 %v1657, %v1659
        %v1661 = vrot.slane %v1653, %v1660
        %v1663 = vunpack.c.l.s4 1934713408
        %v1664 = vunpack.c.0.s8 %v1663
        %v1665 = vlaneseq
        %v1666 = vshrl.u32 %v1665, 7
        %v1667 = vsub.s32 %v1664, %v1666
        %v1668 = vrot.slane %v1654, %v1667
        %v1669 = vcombine.low %v1604, %v1620
        %v1670 = vcombine.high %v1604, %v1620
        %v1672 = vunpack.c.l.s4 1934713408
        %v1673 = vunpack.c.0.s8 %v1672
        %v1674 = vlaneseq
        %v1675 = vshrl.u32 %v1674, 7
        %v1676 = vsub.s32 %v1673, %v1675
        %v1677 = vrot.slane %v1669, %v1676
        %v1679 = vunpack.c.l.s4 1934713408
        %v1680 = vunpack.c.0.s8 %v1679
        %v1681 = vlaneseq
        %v1682 = vshrl.u32 %v1681, 7
        %v1683 = vsub.s32 %v1680, %v1682
        %v1684 = vrot.slane %v1670, %v1683
        %v1685 = vcombine.low %v1629, %v1645
        %v1686 = vcombine.high %v1629, %v1645
        %v1688 = vunpack.c.l.s4 1934713408
        %v1689 = vunpack.c.0.s8 %v1688
        %v1690 = vlaneseq
        %v1691 = vshrl.u32 %v1690, 7
        %v1692 = vsub.s32 %v1689, %v1691
        %v1693 = vrot.slane %v1685, %v1692
        %v1695 = vunpack.c.l.s4 1934713408
        %v1696 = vunpack.c.0.s8 %v1695
        %v1697 = vlaneseq
        %v1698 = vshrl.u32 %v1697, 7
        %v1699 = vsub.s32 %v1696, %v1698
        %v1700 = vrot.slane %v1686, %v1699
        %v1701 = vcombine.low %v1636, %v1652
        %v1702 = vcombine.high %v1636, %v1652
        %v1704 = vunpack.c.l.s4 1934713408
        %v1705 = vunpack.c.0.s8 %v1704
        %v1706 = vlaneseq
        %v1707 = vshrl.u32 %v1706, 7
        %v1708 = vsub.s32 %v1705, %v1707
        %v1709 = vrot.slane %v1701, %v1708
        %v1711 = vunpack.c.l.s4 1934713408
        %v1712 = vunpack.c.0.s8 %v1711
        %v1713 = vlaneseq
        %v1714 = vshrl.u32 %v1713, 7
        %v1715 = vsub.s32 %v1712, %v1714
        %v1716 = vrot.slane %v1702, %v1715
        %v1717 = vcombine.low %v1661, %v1693
        %v1718 = vcombine.high %v1661, %v1693
        %v1719 = vcombine.low %v1668, %v1700
        %v1720 = vcombine.high %v1668, %v1700
        %v1721 = vcombine.low %v1677, %v1709
        %v1722 = vcombine.high %v1677, %v1709
        %v1723 = vcombine.low %v1684, %v1716
        %v1724 = vcombine.high %v1684, %v1716
        %1726 = vrot.lane.b32.xlu0 %v1718, 32
        %v1727 = vpop.permute.xlu0 %1726
        %1730 = vrot.lane.b32.xlu0 %v1719, 64
        %v1731 = vpop.permute.xlu0 %1730
        %1734 = vrot.lane.b32.xlu0 %v1720, 96
        %v1735 = vpop.permute.xlu0 %1734
        %1738 = vrot.lane.b32.xlu0 %v1722, 32
        %v1739 = vpop.permute.xlu0 %1738
        %1742 = vrot.lane.b32.xlu0 %v1723, 64
        %v1743 = vpop.permute.xlu0 %1742
        %1746 = vrot.lane.b32.xlu0 %v1724, 96
        %v1747 = vpop.permute.xlu0 %1746
        %v1749 = vsel %vm1369, %v1717, %v1727
        %vm1750 = vcmask 523264
        %v1751 = vsel %vm1750, %v1749, %v1731
        %vm1752 = vcmask 785408
        %v1753 = vsel %vm1752, %v1751, %v1735
        %v1754 = vsel %vm1369, %v1721, %v1739
        %v1755 = vsel %vm1750, %v1754, %v1743
        %v1756 = vsel %vm1752, %v1755, %v1747
        %1757 = vst [vmem:[%s219] sm:$0xff] %v1753
        %1758 = vst [vmem:[%s219 + $0x8] sm:$0xff] %v1756
        %s1759 = sand.u32 %s125, 1
        %s1760 = scalar_lea.sflag [#allocation3], %s1759
        %s1761 = sand.u32 %s125, 1
        %s1762 = smul.addr %s1761, 16
        %s1763 = scalar_lea.vmem [#allocation2], %s1762
        // Predicated region
        $region37: #{tpu_custom_call.1} parent=35 // pred_check
          %p1764 = pneg %p135
        $region38: #{tpu_custom_call.1} parent=35 // pred_check_branch
          %1766 = sbr.rel (%p1764) target = $region40
        $region39: #{tpu_custom_call.1} parent=35 // pred_region
          %s1768 = ssub.s32 256, 256
          %1769 = vsyncadd %s1760, %s1768
          %s1770 = smul.addr %s18, 2
          %s1771 = smul.addr %s1770, 128
          %s1772 = scalar_lea.hbm %s4, %s1771
          %s1774 = sshll.u32 %s1763, 4
          %s1775 = int_to_ptr.vmem [resolvable:$true] %s1774
          %1777 = dma.vmem_to_hbm [thread:$0]  %s1775, 256, %s1772, %s1760
        $region40: #{tpu_custom_call.1} parent=35 // pred_fallthru
          _
      $region36: #{tpu_custom_call.1} parent=5 // pred_fallthru
        _
      %p1778 = scmp.le.s32.totalorder 2, %s13
      // Predicated region
      $region41: #{tpu_custom_call.1} parent=5 // pred_check
        %p1779 = pneg %p1778
      $region42: #{tpu_custom_call.1} parent=5 // pred_check_branch
        %1781 = sbr.rel (%p1779) target = $region44
      $region43: #{tpu_custom_call.1} parent=5 // pred_region
        %s1782 = ssub.s32 %s13, 2
        // Predicated region
        $region45: #{tpu_custom_call.1} parent=43 // pred_check
          %p1783 = pneg %p141
        $region46: #{tpu_custom_call.1} parent=43 // pred_check_branch
          %1785 = sbr.rel (%p1783) target = $region48
        $region47: #{tpu_custom_call.1} parent=43 // pred_region
          %s1786 = sand.u32 %s126, 1
          %s1787 = scalar_lea.sflag [#allocation3], %s1786
          %s1788 = sand.u32 %s126, 1
          %s1789 = smul.addr %s1788, 16
          %s1790 = scalar_lea.vmem [#allocation2], %s1789
          %1791 = dma.done %s1787, 256
        $region48: #{tpu_custom_call.1} parent=43 // pred_fallthru
          _
      $region44: #{tpu_custom_call.1} parent=5 // pred_fallthru
        _
    $region6: #{tpu_custom_call.1} parent=1 // loop_footer
      %s17 = sadd.s32 1, %s13
    $region7: #{tpu_custom_call.1} parent=1 // loop_footer_branch
      %12 = sbr.rel target = $region3
    $region8: #{tpu_custom_call.1} parent=1 // loop_exit
      _
    %1792 = vsyncpa [#allocation3], 1
    %s1793 = scalar_lea.sflag [#allocation3], 1
    %1794 = vsyncpa %s1793, 1

</llo_original>
